<compile_context>
chip_gen: v5e
topology: v5e:2x2
jax: 0.10.0
libtpu: 0.0.40
codegen_flags: <defaults>
</compile_context>

<pallas_src>
import jax
import jax.numpy as jnp
from jax.experimental import pallas as pl
from jax.experimental.pallas import tpu as pltpu


def decoder_kernel(tok_ref,                 # (T,) int32  scalar-prefetch (SMEM) - used only in index_maps
                   emb_ref,                 # (1, 1, H) bf16  embedding row for this step
                   h0_ref,                  # (1, H)  f32     initial hidden
                   wi_ref, wh_ref,          # (H, 3H) bf16    [Wir|Wiz|Win], [Whr|Whz|Whn]
                   brzn_ref, bhn_ref,       # (1, 3H) f32 [bir+bhr | biz+bhz | bin],  (1, H) f32 bhn
                   wout_ref, bout_ref,      # (H, V) bf16,  (1, V) f32
                   logp_ref,                # (1, 1, V) f32   per-step output block
                   hout_ref,                # (1, H)  f32     final hidden
                   h_scr):                  # (1, H)  f32     VMEM scratch: hidden carry
    t = pl.program_id(0)
    H = h0_ref.shape[-1]

    @pl.when(t == 0)
    def _():
        h_scr[...] = h0_ref[...]

    # relu(embedding(token))
    x = jnp.maximum(emb_ref[0], 0)                          # (1, H) bf16
    h = h_scr[...]                                          # (1, H) f32

    # Fused GRU gates: gi = x @ [Wir|Wiz|Win], gh = h @ [Whr|Whz|Whn]
    gi = jnp.dot(x, wi_ref[...], preferred_element_type=jnp.float32) + brzn_ref[...]
    gh = jnp.dot(h.astype(jnp.bfloat16), wh_ref[...], preferred_element_type=jnp.float32)

    r = jax.nn.sigmoid(gi[:, :H] + gh[:, :H])
    z = jax.nn.sigmoid(gi[:, H:2 * H] + gh[:, H:2 * H])
    n = jnp.tanh(gi[:, 2 * H:] + r * (gh[:, 2 * H:] + bhn_ref[...]))
    h_new = (1.0 - z) * n + z * h                           # (1, H) f32

    h_scr[...] = h_new
    hout_ref[...] = h_new

    # Output projection + LogSoftmax (stable, f32)
    logits = jnp.dot(h_new.astype(jnp.bfloat16), wout_ref[...],
                     preferred_element_type=jnp.float32) + bout_ref[...]
    m = jnp.max(logits, axis=-1, keepdims=True)
    lse = jnp.log(jnp.sum(jnp.exp(logits - m), axis=-1, keepdims=True)) + m
    logp_ref[0] = logits - lse                              # (1, V)


def decoder_steps(tokens, hidden, params):
    """Run T chained decoder.forward() steps (teacher forced) in one pallas_call.

    tokens: (T,) int32 ; hidden: (1, 1, H) f32.
    Returns (log_probs (T, V) f32, new_hidden (1, 1, H) f32)."""
    emb = params["emb"]                     # (V_emb, H) bf16
    V_emb, H = emb.shape
    V = params["bout"].shape[1]
    T = tokens.shape[0]

    emb3 = emb.reshape(V_emb, 1, H)         # 3-D so the gathered block is (1, 1, H)
    h0 = hidden.reshape(1, H).astype(jnp.float32)

    grid_spec = pltpu.PrefetchScalarGridSpec(
        num_scalar_prefetch=1,
        grid=(T,),
        in_specs=[
            pl.BlockSpec((1, 1, H), lambda t, tok: (tok[t], 0, 0)),    # embedding row gather
            pl.BlockSpec((1, H), lambda t, tok: (0, 0)),               # h0
            pl.BlockSpec((H, 3 * H), lambda t, tok: (0, 0)),           # Wi (resident)
            pl.BlockSpec((H, 3 * H), lambda t, tok: (0, 0)),           # Wh (resident)
            pl.BlockSpec((1, 3 * H), lambda t, tok: (0, 0)),           # b_rzn
            pl.BlockSpec((1, H), lambda t, tok: (0, 0)),               # b_hn
            pl.BlockSpec((H, V), lambda t, tok: (0, 0)),               # Wout (resident)
            pl.BlockSpec((1, V), lambda t, tok: (0, 0)),               # bout
        ],
        out_specs=(
            pl.BlockSpec((1, 1, V), lambda t, tok: (t, 0, 0)),         # log-probs per step
            pl.BlockSpec((1, H), lambda t, tok: (0, 0)),               # final hidden
        ),
        scratch_shapes=[pltpu.VMEM((1, H), jnp.float32)],              # hidden carry (stays in VMEM)
    )

    logp3, h_new = pl.pallas_call(
        decoder_kernel,
        grid_spec=grid_spec,
        out_shape=(jax.ShapeDtypeStruct((T, 1, V), jnp.float32),
                   jax.ShapeDtypeStruct((1, H), jnp.float32)),
        compiler_params=pltpu.CompilerParams(
            dimension_semantics=("arbitrary",)),   # sequential: step t+1 depends on step t's hidden
    )(tokens, emb3, h0,
      params["wi"], params["wh"], params["b_rzn"], params["b_hn"],
      params["wout"], params["bout"])

    return logp3.reshape(T, V), h_new.reshape(1, 1, H)


def decoder_forward(token, hidden, params):
    """Single step, same signature/semantics as the torch module's forward."""
    tokens = jnp.asarray(token, jnp.int32).reshape(1)
    logp, h_new = decoder_steps(tokens, hidden, params)
    return logp, h_new                       # (1, V), (1, 1, H)


def decoder_ref(tokens, hidden, params):
    """Pure-JAX reference (mirrors the kernel's bf16 weight / f32 accumulate math)."""
    H = params["b_hn"].shape[1]
    emb = params["emb"].astype(jnp.float32)
    wi = params["wi"].astype(jnp.float32)
    wh = params["wh"].astype(jnp.float32)
    wout = params["wout"].astype(jnp.float32)
    hp = jax.lax.Precision.HIGHEST
    h = hidden.reshape(1, H).astype(jnp.float32)
    outs = []
    for t in range(int(tokens.shape[0])):
        x = jnp.maximum(emb[tokens[t]][None, :], 0.0)
        gi = jnp.dot(x, wi, precision=hp) + params["b_rzn"]
        gh = jnp.dot(h.astype(jnp.bfloat16).astype(jnp.float32), wh, precision=hp)
        r = jax.nn.sigmoid(gi[:, :H] + gh[:, :H])
        z = jax.nn.sigmoid(gi[:, H:2 * H] + gh[:, H:2 * H])
        n = jnp.tanh(gi[:, 2 * H:] + r * (gh[:, 2 * H:] + params["b_hn"]))
        h = (1.0 - z) * n + z * h
        logits = jnp.dot(h.astype(jnp.bfloat16).astype(jnp.float32), wout,
                         precision=hp) + params["bout"]
        outs.append(jax.nn.log_softmax(logits, axis=-1))
    return jnp.concatenate(outs, axis=0), h.reshape(1, 1, H)


def init_params(key, hidden_size, output_size):
    """Deterministic synthetic parameters, same shapes as the torch module
    (weights stored transposed (in, out); GRU gates concatenated as [r|z|n])."""
    H, V = hidden_size, output_size
    ks = jax.random.split(key, 16)
    s = 0.1
    emb = jax.random.normal(ks[0], (V, H), jnp.float32) * s
    wir = jax.random.normal(ks[1], (H, H), jnp.float32) * s
    wiz = jax.random.normal(ks[2], (H, H), jnp.float32) * s
    win = jax.random.normal(ks[3], (H, H), jnp.float32) * s
    whr = jax.random.normal(ks[4], (H, H), jnp.float32) * s
    whz = jax.random.normal(ks[5], (H, H), jnp.float32) * s
    whn = jax.random.normal(ks[6], (H, H), jnp.float32) * s
    bir = jax.random.normal(ks[7], (1, H), jnp.float32) * s
    biz = jax.random.normal(ks[8], (1, H), jnp.float32) * s
    bin_ = jax.random.normal(ks[9], (1, H), jnp.float32) * s
    bhr = jax.random.normal(ks[10], (1, H), jnp.float32) * s
    bhz = jax.random.normal(ks[11], (1, H), jnp.float32) * s
    bhn = jax.random.normal(ks[12], (1, H), jnp.float32) * s
    wout = jax.random.normal(ks[13], (H, V), jnp.float32) * s
    bout = jax.random.normal(ks[14], (1, V), jnp.float32) * s

    return {
        "emb": emb.astype(jnp.bfloat16),                                      # (V, H)
        "wi": jnp.concatenate([wir, wiz, win], axis=1).astype(jnp.bfloat16),  # (H, 3H)
        "wh": jnp.concatenate([whr, whz, whn], axis=1).astype(jnp.bfloat16),  # (H, 3H)
        "b_rzn": jnp.concatenate([bir + bhr, biz + bhz, bin_], axis=1),       # (1, 3H) f32
        "b_hn": bhn,                                                          # (1, H)  f32
        "wout": wout.astype(jnp.bfloat16),                                    # (H, V)
        "bout": bout,                                                         # (1, V)  f32
    }


if __name__ == "__main__":
    hidden_size = 256      # matches the module spec (hidden_size = 256)
    output_size = 512      # vocab size (multiple of 128 -> lane-dense logits)

    key = jax.random.PRNGKey(0)
    params = init_params(key, hidden_size, output_size)
    hidden = jnp.zeros((1, 1, hidden_size), jnp.float32)      # Decoder.initHidden()

    # --- single step: identical semantics to module.forward(input, hidden) ---
    token = jnp.int32(5)
    log_probs, new_hidden = decoder_forward(token, hidden, params)
    jax.block_until_ready((log_probs, new_hidden))
    assert log_probs.shape == (1, output_size)
    assert new_hidden.shape == (1, 1, hidden_size)
    assert jnp.allclose(jnp.sum(jnp.exp(log_probs)), 1.0, atol=1e-3)

    # --- fused multi-step decode (8 chained forward() calls in one pallas_call) ---
    T = 8
    tokens = jax.random.randint(jax.random.PRNGKey(1), (T,), 0, output_size, jnp.int32)
    logp_T, hidden_T = decoder_steps(tokens, hidden, params)
    jax.block_until_ready((logp_T, hidden_T))
    assert logp_T.shape == (T, output_size)
    assert hidden_T.shape == (1, 1, hidden_size)

    # correctness vs pure-JAX reference
    ref_logp, ref_hidden = decoder_ref(tokens, hidden, params)
    assert jnp.allclose(logp_T, ref_logp, atol=1e-2), float(jnp.max(jnp.abs(logp_T - ref_logp)))
    assert jnp.allclose(hidden_T, ref_hidden, atol=1e-2)
    # single-step result matches the first fused step for the same starting hidden
    logp0, _ = decoder_forward(tokens[0], hidden, params)
    assert jnp.allclose(logp0, logp_T[0:1], atol=1e-3)

    print("KERNEL_OK")
</pallas_src>

<mosaic_0001>
module attributes {stable_mosaic.version = 11 : i64} {
  func.func @decoder_kernel(%arg0: i32, %arg1: memref<1xi32, #tpu.memory_space<smem>>, %arg2: memref<1x1x256xbf16, #tpu.memory_space<vmem>>, %arg3: memref<1x256xf32, #tpu.memory_space<vmem>>, %arg4: memref<256x768xbf16, #tpu.memory_space<vmem>>, %arg5: memref<256x768xbf16, #tpu.memory_space<vmem>>, %arg6: memref<1x768xf32, #tpu.memory_space<vmem>>, %arg7: memref<1x256xf32, #tpu.memory_space<vmem>>, %arg8: memref<256x512xbf16, #tpu.memory_space<vmem>>, %arg9: memref<1x512xf32, #tpu.memory_space<vmem>>, %arg10: memref<1x1x512xf32, #tpu.memory_space<vmem>>, %arg11: memref<1x256xf32, #tpu.memory_space<vmem>>, %arg12: memref<1x256xf32, #tpu.memory_space<vmem>>) attributes {dimension_semantics = [#tpu.dimension_semantics<arbitrary>], iteration_bounds = array<i64: 1>, scalar_prefetch = 1 : i64, scratch_operands = 1 : i64, tpu.core_type = #tpu.core_type<tc>, window_params = [{transform_indices = @transform_0, window_bounds = array<i64: 1, 1, 256>}, {pipeline_mode = #tpu.pipeline_mode<synchronous>, transform_indices = @transform_1, window_bounds = array<i64: 1, 256>}, {pipeline_mode = #tpu.pipeline_mode<synchronous>, transform_indices = @transform_2, window_bounds = array<i64: 256, 768>}, {pipeline_mode = #tpu.pipeline_mode<synchronous>, transform_indices = @transform_3, window_bounds = array<i64: 256, 768>}, {pipeline_mode = #tpu.pipeline_mode<synchronous>, transform_indices = @transform_4, window_bounds = array<i64: 1, 768>}, {pipeline_mode = #tpu.pipeline_mode<synchronous>, transform_indices = @transform_5, window_bounds = array<i64: 1, 256>}, {pipeline_mode = #tpu.pipeline_mode<synchronous>, transform_indices = @transform_6, window_bounds = array<i64: 256, 512>}, {pipeline_mode = #tpu.pipeline_mode<synchronous>, transform_indices = @transform_7, window_bounds = array<i64: 1, 512>}, {transform_indices = @transform_8, window_bounds = array<i64: 1, 1, 512>}, {pipeline_mode = #tpu.pipeline_mode<synchronous>, transform_indices = @transform_9, window_bounds = array<i64: 1, 256>}]} {
    %c0_i32 = arith.constant 0 : i32
    %0 = arith.cmpi eq, %arg0, %c0_i32 : i32
    %1 = arith.extui %0 : i1 to i32
    %c0_i32_0 = arith.constant 0 : i32
    %2 = arith.cmpi ne, %1, %c0_i32_0 : i32
    scf.if %2 {
      %c0_32 = arith.constant 0 : index
      %c0_33 = arith.constant 0 : index
      %64 = vector.load %arg3[%c0_32, %c0_33] : memref<1x256xf32, #tpu.memory_space<vmem>>, vector<1x256xf32>
      %c0_34 = arith.constant 0 : index
      %c0_35 = arith.constant 0 : index
      %65 = vector.load %arg12[%c0_34, %c0_35] : memref<1x256xf32, #tpu.memory_space<vmem>>, vector<1x256xf32>
      tpu.vector_store %arg12[%c0_34, %c0_35], %64 {strides = array<i32>} : memref<1x256xf32, #tpu.memory_space<vmem>>, vector<1x256xf32>,
    } else {
    }
    %c0 = arith.constant 0 : index
    %c0_1 = arith.constant 0 : index
    %c0_2 = arith.constant 0 : index
    %3 = vector.load %arg2[%c0, %c0_1, %c0_2] : memref<1x1x256xbf16, #tpu.memory_space<vmem>>, vector<1x1x256xbf16>
    %4 = vector.shape_cast %3 : vector<1x1x256xbf16> to vector<1x256xbf16>
    %cst = arith.constant 0.000000e+00 : bf16
    %5 = vector.broadcast %cst : bf16 to vector<1x256xbf16>
    %6 = arith.maximumf %4, %5 : vector<1x256xbf16>
    %c0_3 = arith.constant 0 : index
    %c0_4 = arith.constant 0 : index
    %7 = vector.load %arg12[%c0_3, %c0_4] : memref<1x256xf32, #tpu.memory_space<vmem>>, vector<1x256xf32>
    %c0_5 = arith.constant 0 : index
    %c0_6 = arith.constant 0 : index
    %8 = vector.load %arg4[%c0_5, %c0_6] : memref<256x768xbf16, #tpu.memory_space<vmem>>, vector<256x768xbf16>
    %cst_7 = arith.constant dense<0.000000e+00> : vector<1x768xf32>
    %9 = tpu.matmul %6, %8, %cst_7 {dimension_numbers = #tpu.dot_dimension_numbers<[1], [0], [0], [1], [0, 0, 1, 1], [], []>} : vector<1x256xbf16>, vector<256x768xbf16>, vector<1x768xf32> -> vector<1x768xf32>
    %c0_8 = arith.constant 0 : index
    %c0_9 = arith.constant 0 : index
    %10 = vector.load %arg6[%c0_8, %c0_9] : memref<1x768xf32, #tpu.memory_space<vmem>>, vector<1x768xf32>
    %11 = arith.addf %9, %10 : vector<1x768xf32>
    %12 = arith.truncf %7 : vector<1x256xf32> to vector<1x256xbf16>
    %c0_10 = arith.constant 0 : index
    %c0_11 = arith.constant 0 : index
    %13 = vector.load %arg5[%c0_10, %c0_11] : memref<256x768xbf16, #tpu.memory_space<vmem>>, vector<256x768xbf16>
    %cst_12 = arith.constant dense<0.000000e+00> : vector<1x768xf32>
    %14 = tpu.matmul %12, %13, %cst_12 {dimension_numbers = #tpu.dot_dimension_numbers<[1], [0], [0], [1], [0, 0, 1, 1], [], []>} : vector<1x256xbf16>, vector<256x768xbf16>, vector<1x768xf32> -> vector<1x768xf32>
    %15 = vector.extract_strided_slice %11 {offsets = [0, 0], sizes = [1, 256], strides = [1, 1]} : vector<1x768xf32> to vector<1x256xf32>
    %16 = vector.extract_strided_slice %14 {offsets = [0, 0], sizes = [1, 256], strides = [1, 1]} : vector<1x768xf32> to vector<1x256xf32>
    %17 = arith.addf %15, %16 : vector<1x256xf32>
    %18 = arith.negf %17 : vector<1x256xf32>
    %19 = math.exp %18 : vector<1x256xf32>
    %cst_13 = arith.constant 1.000000e+00 : f32
    %20 = vector.broadcast %cst_13 : f32 to vector<1x256xf32>
    %21 = arith.addf %20, %19 : vector<1x256xf32>
    %22 = arith.divf %20, %21 : vector<1x256xf32>
    %23 = vector.extract_strided_slice %11 {offsets = [0, 256], sizes = [1, 256], strides = [1, 1]} : vector<1x768xf32> to vector<1x256xf32>
    %24 = vector.extract_strided_slice %14 {offsets = [0, 256], sizes = [1, 256], strides = [1, 1]} : vector<1x768xf32> to vector<1x256xf32>
    %25 = arith.addf %23, %24 : vector<1x256xf32>
    %26 = arith.negf %25 : vector<1x256xf32>
    %27 = math.exp %26 : vector<1x256xf32>
    %cst_14 = arith.constant 1.000000e+00 : f32
    %28 = vector.broadcast %cst_14 : f32 to vector<1x256xf32>
    %29 = arith.addf %28, %27 : vector<1x256xf32>
    %30 = arith.divf %28, %29 : vector<1x256xf32>
    %31 = vector.extract_strided_slice %11 {offsets = [0, 512], sizes = [1, 256], strides = [1, 1]} : vector<1x768xf32> to vector<1x256xf32>
    %32 = vector.extract_strided_slice %14 {offsets = [0, 512], sizes = [1, 256], strides = [1, 1]} : vector<1x768xf32> to vector<1x256xf32>
    %c0_15 = arith.constant 0 : index
    %c0_16 = arith.constant 0 : index
    %33 = vector.load %arg7[%c0_15, %c0_16] : memref<1x256xf32, #tpu.memory_space<vmem>>, vector<1x256xf32>
    %34 = arith.addf %32, %33 : vector<1x256xf32>
    %35 = arith.mulf %22, %34 : vector<1x256xf32>
    %36 = arith.addf %31, %35 : vector<1x256xf32>
    %37 = math.tanh %36 : vector<1x256xf32>
    %cst_17 = arith.constant 1.000000e+00 : f32
    %38 = vector.broadcast %cst_17 : f32 to vector<1x256xf32>
    %39 = arith.subf %38, %30 : vector<1x256xf32>
    %40 = arith.mulf %39, %37 : vector<1x256xf32>
    %41 = arith.mulf %30, %7 : vector<1x256xf32>
    %42 = arith.addf %40, %41 : vector<1x256xf32>
    %c0_18 = arith.constant 0 : index
    %c0_19 = arith.constant 0 : index
    %43 = vector.load %arg12[%c0_18, %c0_19] : memref<1x256xf32, #tpu.memory_space<vmem>>, vector<1x256xf32>
    tpu.vector_store %arg12[%c0_18, %c0_19], %42 {strides = array<i32>} : memref<1x256xf32, #tpu.memory_space<vmem>>, vector<1x256xf32>,
    %c0_20 = arith.constant 0 : index
    %c0_21 = arith.constant 0 : index
    %44 = vector.load %arg11[%c0_20, %c0_21] : memref<1x256xf32, #tpu.memory_space<vmem>>, vector<1x256xf32>
    tpu.vector_store %arg11[%c0_20, %c0_21], %42 {strides = array<i32>} : memref<1x256xf32, #tpu.memory_space<vmem>>, vector<1x256xf32>,
    %45 = arith.truncf %42 : vector<1x256xf32> to vector<1x256xbf16>
    %c0_22 = arith.constant 0 : index
    %c0_23 = arith.constant 0 : index
    %46 = vector.load %arg8[%c0_22, %c0_23] : memref<256x512xbf16, #tpu.memory_space<vmem>>, vector<256x512xbf16>
    %cst_24 = arith.constant dense<0.000000e+00> : vector<1x512xf32>
    %47 = tpu.matmul %45, %46, %cst_24 {dimension_numbers = #tpu.dot_dimension_numbers<[1], [0], [0], [1], [0, 0, 1, 1], [], []>} : vector<1x256xbf16>, vector<256x512xbf16>, vector<1x512xf32> -> vector<1x512xf32>
    %c0_25 = arith.constant 0 : index
    %c0_26 = arith.constant 0 : index
    %48 = vector.load %arg9[%c0_25, %c0_26] : memref<1x512xf32, #tpu.memory_space<vmem>>, vector<1x512xf32>
    %49 = arith.addf %47, %48 : vector<1x512xf32>
    %cst_27 = arith.constant dense<0xFF800000> : vector<1xf32>
    %50 = vector.multi_reduction <maximumf>, %49, %cst_27 [1] : vector<1x512xf32> to vector<1xf32>
    %51 = vector.shape_cast %50 : vector<1xf32> to vector<1x1xf32>
    %52 = vector.broadcast %51 : vector<1x1xf32> to vector<1x512xf32>
    %53 = arith.subf %49, %52 : vector<1x512xf32>
    %54 = math.exp %53 : vector<1x512xf32>
    %cst_28 = arith.constant dense<0.000000e+00> : vector<1xf32>
    %55 = vector.multi_reduction <add>, %54, %cst_28 [1] : vector<1x512xf32> to vector<1xf32>
    %56 = vector.shape_cast %55 : vector<1xf32> to vector<1x1xf32>
    %57 = math.log %56 : vector<1x1xf32>
    %58 = arith.addf %57, %51 : vector<1x1xf32>
    %59 = vector.broadcast %58 : vector<1x1xf32> to vector<1x512xf32>
    %60 = arith.subf %49, %59 : vector<1x512xf32>
    %c0_29 = arith.constant 0 : index
    %c0_30 = arith.constant 0 : index
    %c0_31 = arith.constant 0 : index
    %61 = vector.load %arg10[%c0_29, %c0_30, %c0_31] : memref<1x1x512xf32, #tpu.memory_space<vmem>>, vector<1x1x512xf32>
    %62 = vector.shape_cast %61 : vector<1x1x512xf32> to vector<1x512xf32>
    %63 = vector.shape_cast %60 : vector<1x512xf32> to vector<1x1x512xf32>
    tpu.vector_store %arg10[%c0_29, %c0_30, %c0_31], %63 {strides = array<i32>} : memref<1x1x512xf32, #tpu.memory_space<vmem>>, vector<1x1x512xf32>,
    return
  }
  func.func @transform_0(%arg0: i32, %arg1: memref<1xi32, #tpu.memory_space<smem>>) -> (i32, i32, i32) {
    %0 = arith.index_cast %arg0 : i32 to index
    %1 = memref.load %arg1[%0] : memref<1xi32, #tpu.memory_space<smem>>
    %c0_i32 = arith.constant 0 : i32
    %c0_i32_0 = arith.constant 0 : i32
    %c0_i32_1 = arith.constant 0 : i32
    return %1, %c0_i32, %c0_i32_0 : i32, i32, i32
  }
  func.func @transform_1(%arg0: i32, %arg1: memref<1xi32, #tpu.memory_space<smem>>) -> (i32, i32) {
    %c0_i32 = arith.constant 0 : i32
    %c0_i32_0 = arith.constant 0 : i32
    %c0_i32_1 = arith.constant 0 : i32
    return %c0_i32, %c0_i32_0 : i32, i32
  }
  func.func @transform_2(%arg0: i32, %arg1: memref<1xi32, #tpu.memory_space<smem>>) -> (i32, i32) {
    %c0_i32 = arith.constant 0 : i32
    %c0_i32_0 = arith.constant 0 : i32
    %c0_i32_1 = arith.constant 0 : i32
    return %c0_i32, %c0_i32_0 : i32, i32
  }
  func.func @transform_3(%arg0: i32, %arg1: memref<1xi32, #tpu.memory_space<smem>>) -> (i32, i32) {
    %c0_i32 = arith.constant 0 : i32
    %c0_i32_0 = arith.constant 0 : i32
    %c0_i32_1 = arith.constant 0 : i32
    return %c0_i32, %c0_i32_0 : i32, i32
  }
  func.func @transform_4(%arg0: i32, %arg1: memref<1xi32, #tpu.memory_space<smem>>) -> (i32, i32) {
    %c0_i32 = arith.constant 0 : i32
    %c0_i32_0 = arith.constant 0 : i32
    %c0_i32_1 = arith.constant 0 : i32
    return %c0_i32, %c0_i32_0 : i32, i32
  }
  func.func @transform_5(%arg0: i32, %arg1: memref<1xi32, #tpu.memory_space<smem>>) -> (i32, i32) {
    %c0_i32 = arith.constant 0 : i32
    %c0_i32_0 = arith.constant 0 : i32
    %c0_i32_1 = arith.constant 0 : i32
    return %c0_i32, %c0_i32_0 : i32, i32
  }
  func.func @transform_6(%arg0: i32, %arg1: memref<1xi32, #tpu.memory_space<smem>>) -> (i32, i32) {
    %c0_i32 = arith.constant 0 : i32
    %c0_i32_0 = arith.constant 0 : i32
    %c0_i32_1 = arith.constant 0 : i32
    return %c0_i32, %c0_i32_0 : i32, i32
  }
  func.func @transform_7(%arg0: i32, %arg1: memref<1xi32, #tpu.memory_space<smem>>) -> (i32, i32) {
    %c0_i32 = arith.constant 0 : i32
    %c0_i32_0 = arith.constant 0 : i32
    %c0_i32_1 = arith.constant 0 : i32
    return %c0_i32, %c0_i32_0 : i32, i32
  }
  func.func @transform_8(%arg0: i32, %arg1: memref<1xi32, #tpu.memory_space<smem>>) -> (i32, i32, i32) {
    %c0_i32 = arith.constant 0 : i32
    %c0_i32_0 = arith.constant 0 : i32
    %c0_i32_1 = arith.constant 0 : i32
    return %arg0, %c0_i32, %c0_i32_0 : i32, i32, i32
  }
  func.func @transform_9(%arg0: i32, %arg1: memref<1xi32, #tpu.memory_space<smem>>) -> (i32, i32) {
    %c0_i32 = arith.constant 0 : i32
    %c0_i32_0 = arith.constant 0 : i32
    %c0_i32_1 = arith.constant 0 : i32
    return %c0_i32, %c0_i32_0 : i32, i32
  }
}

</mosaic_0001>

<llo_original>
// kernel: tpu_custom_call.1
$region0: #{tpu_custom_call.1}
  #allocation0 [shape = 'u32[]', space=smem, size = 0x4, offset = 0x4, fixed_abs, tag = 'smem constant byte address 0x4 - core index']
  #allocation1 [shape = 'u32[72,128]{1,0:T(1,128)}', space=vmem, size = 0x9000, scoped, tag = 'internal scratch']
  #allocation2 [shape = 'f32[1,256]{1,0:T(1,128)}', space=vmem, size = 0x400, scoped, tag = 'scratch operand']
  #allocation3 [shape = 's32[1]{0}', space=sflag, size = 0x4, scoped, tag = 'scoped memory for tpu_custom_call.1']
  #allocation4 [shape = 's32[1]{0:T(128)S(6)}', space=smem, size = 0x200, scoped, tag = 'prefetched SMEM operand 0']
  %s0 = inlined_call_operand.<no memory space> [shape: s32[1], index: 0, kind: input, shape index: {}]
  %s1 = inlined_call_operand.vmem [shape: bf16[512,1,256], index: 1, kind: input, shape index: {}]
  %s2 = inlined_call_operand.hbm [shape: f32[1,256], index: 2, kind: input, shape index: {}]
  %s3 = inlined_call_operand.vmem [shape: bf16[256,768], index: 3, kind: input, shape index: {}]
  %s4 = inlined_call_operand.vmem [shape: bf16[256,768], index: 4, kind: input, shape index: {}]
  %s5 = inlined_call_operand.hbm [shape: f32[1,768], index: 5, kind: input, shape index: {}]
  %s6 = inlined_call_operand.hbm [shape: f32[1,256], index: 6, kind: input, shape index: {}]
  %s7 = inlined_call_operand.hbm [shape: bf16[256,512], index: 7, kind: input, shape index: {}]
  %s8 = inlined_call_operand.hbm [shape: f32[1,512], index: 8, kind: input, shape index: {}]
  %s9 = inlined_call_operand.hbm [shape: f32[1,1,512], index: 9, kind: output, shape index: {0}]
  %s10 = inlined_call_operand.hbm [shape: f32[1,256], index: 10, kind: output, shape index: {1}]
  %11 = xla_tuple %s9, %s10
  %s12 = sld [smem:[#allocation0]]
  $region74: #{tpu_custom_call.1} parent=0
    _
  %s14 = ssub.s32 1, %s12
  %s15 = scalar_select 0, %s14, %s12
  %16 = sst [smem:[#allocation4]] %s0
  $region1: #{tpu_custom_call.1} parent=0
    #allocation5 [shape = 'u8[1024]{0}', space=vmem, size = 0x400, scoped, tag = 'input window, operand 2, single buffered']
    #allocation6 [shape = 's32[1]{0}', space=sflag, size = 0x4, scoped, tag = 'scoped memory for tpu_custom_call.1']
    #allocation7 [shape = 's32[1]{0}', space=sflag, size = 0x4, scoped, tag = 'scoped memory for tpu_custom_call.1']
    #allocation8 [shape = 'u8[3072]{0}', space=vmem, size = 0xc00, scoped, tag = 'input window, operand 5, single buffered']
    #allocation9 [shape = 's32[1]{0}', space=sflag, size = 0x4, scoped, tag = 'scoped memory for tpu_custom_call.1']
    #allocation10 [shape = 'u8[1024]{0}', space=vmem, size = 0x400, scoped, tag = 'input window, operand 6, single buffered']
    #allocation11 [shape = 'u8[262144]{0}', space=vmem, size = 0x40000, scoped, tag = 'input window, operand 7, single buffered']
    #allocation12 [shape = 's32[1]{0}', space=sflag, size = 0x4, scoped, tag = 'scoped memory for tpu_custom_call.1']
    #allocation13 [shape = 'u8[2048]{0}', space=vmem, size = 0x800, scoped, tag = 'input window, operand 8, single buffered']
    #allocation14 [shape = 'u8[2048]{0}', space=vmem, size = 0x800, scoped, tag = 'output window, operand 0, single buffered']
    #allocation15 [shape = 'u8[1024]{0}', space=vmem, size = 0x400, scoped, tag = 'output window, operand 1, single buffered']
    #allocation16 [shape = 's32[1]{0}', space=sflag, size = 0x4, scoped, tag = 'scoped memory for tpu_custom_call.1']
    %17 = vsyncpa [#allocation6], 0
    %18 = vsyncpa [#allocation9], 0
    %19 = vsyncpa [#allocation12], 0
    %20 = vsyncpa [#allocation7], 0
    %21 = vsyncpa [#allocation16], 0
    // Predicated region
    $region2: #{tpu_custom_call.1} parent=1 // pred_check
      _
    $region3: #{tpu_custom_call.1} parent=1 // pred_check_branch
      %23 = sbr.rel (0) target = $region5
    $region4: #{tpu_custom_call.1} parent=1 // pred_region
      %s24 = sld [smem:[#allocation4]]
      %p25 = scmp.lt.s32.totalorder %s24, 511
      %s26 = scalar_select %p25, %s24, 511
      %s27 = smul.addr %s26, 2
      %s28 = scalar_lea.vmem %s1, %s27
      %s29 = sld [smem:[#allocation4]]
    $region5: #{tpu_custom_call.1} parent=1 // pred_fallthru
      _
    // Predicated region
    $region6: #{tpu_custom_call.1} parent=1 // pred_check
      _
    $region7: #{tpu_custom_call.1} parent=1 // pred_check_branch
      %31 = sbr.rel (0) target = $region9
    $region8: #{tpu_custom_call.1} parent=1 // pred_region
      %33 = vsyncadd [#allocation6], 0
      %s35 = sshll.u32 %s2, 4
      %s36 = int_to_ptr.hbm [resolvable:$true] %s35
      %s37 = sshll.u32 [#allocation5], 4
      %s38 = int_to_ptr.vmem [resolvable:$true] %s37
      %40 = dma.hbm_to_vmem [thread:$0]  %s36, 32, %s38, [#allocation6]
    $region9: #{tpu_custom_call.1} parent=1 // pred_fallthru
      _
    // Predicated region
    $region10: #{tpu_custom_call.1} parent=1 // pred_check
      _
    $region11: #{tpu_custom_call.1} parent=1 // pred_check_branch
      %42 = sbr.rel (0) target = $region13
    $region12: #{tpu_custom_call.1} parent=1 // pred_region
      _
    $region13: #{tpu_custom_call.1} parent=1 // pred_fallthru
      _
    // Predicated region
    $region14: #{tpu_custom_call.1} parent=1 // pred_check
      _
    $region15: #{tpu_custom_call.1} parent=1 // pred_check_branch
      %44 = sbr.rel (0) target = $region17
    $region16: #{tpu_custom_call.1} parent=1 // pred_region
      _
    $region17: #{tpu_custom_call.1} parent=1 // pred_fallthru
      _
    // Predicated region
    $region18: #{tpu_custom_call.1} parent=1 // pred_check
      _
    $region19: #{tpu_custom_call.1} parent=1 // pred_check_branch
      %46 = sbr.rel (0) target = $region21
    $region20: #{tpu_custom_call.1} parent=1 // pred_region
      %48 = vsyncadd [#allocation9], 0
      %s50 = sshll.u32 %s5, 4
      %s51 = int_to_ptr.hbm [resolvable:$true] %s50
      %s52 = sshll.u32 [#allocation8], 4
      %s53 = int_to_ptr.vmem [resolvable:$true] %s52
      %55 = dma.hbm_to_vmem [thread:$0]  %s51, 96, %s53, [#allocation9]
    $region21: #{tpu_custom_call.1} parent=1 // pred_fallthru
      _
    // Predicated region
    $region22: #{tpu_custom_call.1} parent=1 // pred_check
      _
    $region23: #{tpu_custom_call.1} parent=1 // pred_check_branch
      %57 = sbr.rel (0) target = $region25
    $region24: #{tpu_custom_call.1} parent=1 // pred_region
      %59 = vsyncadd [#allocation9], 0
      %s61 = sshll.u32 %s6, 4
      %s62 = int_to_ptr.hbm [resolvable:$true] %s61
      %s63 = sshll.u32 [#allocation10], 4
      %s64 = int_to_ptr.vmem [resolvable:$true] %s63
      %66 = dma.hbm_to_vmem [thread:$0]  %s62, 32, %s64, [#allocation9]
    $region25: #{tpu_custom_call.1} parent=1 // pred_fallthru
      _
    // Predicated region
    $region26: #{tpu_custom_call.1} parent=1 // pred_check
      _
    $region27: #{tpu_custom_call.1} parent=1 // pred_check_branch
      %68 = sbr.rel (0) target = $region29
    $region28: #{tpu_custom_call.1} parent=1 // pred_region
      %70 = vsyncadd [#allocation12], 0
      %s71 = sshll.u32 %s7, 4
      %s72 = int_to_ptr.hbm [resolvable:$true] %s71
      %s73 = sshll.u32 [#allocation11], 4
      %s74 = int_to_ptr.vmem [resolvable:$true] %s73
      %79 = dma.hbm_to_vmem [thread:$0]  %s72, 8192, %s74, [#allocation12], 256, 256, 16
    $region29: #{tpu_custom_call.1} parent=1 // pred_fallthru
      _
    // Predicated region
    $region30: #{tpu_custom_call.1} parent=1 // pred_check
      _
    $region31: #{tpu_custom_call.1} parent=1 // pred_check_branch
      %81 = sbr.rel (0) target = $region33
    $region32: #{tpu_custom_call.1} parent=1 // pred_region
      %83 = vsyncadd [#allocation12], 0
      %s85 = sshll.u32 %s8, 4
      %s86 = int_to_ptr.hbm [resolvable:$true] %s85
      %s87 = sshll.u32 [#allocation13], 4
      %s88 = int_to_ptr.vmem [resolvable:$true] %s87
      %90 = dma.hbm_to_vmem [thread:$0]  %s86, 64, %s88, [#allocation12]
    $region33: #{tpu_custom_call.1} parent=1 // pred_fallthru
      _
    // Predicated region
    $region34: #{tpu_custom_call.1} parent=1 // pred_check
      _
    $region35: #{tpu_custom_call.1} parent=1 // pred_check_branch
      %92 = sbr.rel (0) target = $region37
    $region36: #{tpu_custom_call.1} parent=1 // pred_region
      %94 = dma.done [#allocation6], 32
    $region37: #{tpu_custom_call.1} parent=1 // pred_fallthru
      _
    // Predicated region
    $region38: #{tpu_custom_call.1} parent=1 // pred_check
      _
    $region39: #{tpu_custom_call.1} parent=1 // pred_check_branch
      %96 = sbr.rel (0) target = $region41
    $region40: #{tpu_custom_call.1} parent=1 // pred_region
      %98 = dma.done [#allocation9], 96
    $region41: #{tpu_custom_call.1} parent=1 // pred_fallthru
      _
    // Predicated region
    $region42: #{tpu_custom_call.1} parent=1 // pred_check
      _
    $region43: #{tpu_custom_call.1} parent=1 // pred_check_branch
      %100 = sbr.rel (0) target = $region45
    $region44: #{tpu_custom_call.1} parent=1 // pred_region
      %102 = dma.done [#allocation9], 32
    $region45: #{tpu_custom_call.1} parent=1 // pred_fallthru
      _
    // Predicated region
    $region46: #{tpu_custom_call.1} parent=1 // pred_check
      _
    $region47: #{tpu_custom_call.1} parent=1 // pred_check_branch
      %104 = sbr.rel (0) target = $region49
    $region48: #{tpu_custom_call.1} parent=1 // pred_region
      %106 = dma.done [#allocation12], 8192
    $region49: #{tpu_custom_call.1} parent=1 // pred_fallthru
      _
    // Predicated region
    $region50: #{tpu_custom_call.1} parent=1 // pred_check
      _
    $region51: #{tpu_custom_call.1} parent=1 // pred_check_branch
      %108 = sbr.rel (0) target = $region53
    $region52: #{tpu_custom_call.1} parent=1 // pred_region
      %110 = dma.done [#allocation12], 64
    $region53: #{tpu_custom_call.1} parent=1 // pred_fallthru
      _
    %s111 = sld [smem:[#allocation4]]
    %p112 = scmp.lt.s32.totalorder %s111, 511
    %s113 = scalar_select %p112, %s111, 511
    %s114 = smul.addr %s113, 2
    %s115 = scalar_lea.vmem %s1, %s114
    %s116 = sld [smem:[#allocation4]]
    %p117 = scmp.lt.s32.totalorder %s116, 511
    %s118 = scalar_select %p117, %s116, 511
    %s119 = smul.addr %s118, 2
    %s120 = scalar_lea.vmem %s1, %s119
    %s121 = sld [smem:[#allocation4]]
    %p122 = scmp.eq.s32.totalorder 0, 0
    // Predicated region
    $region54: #{tpu_custom_call.1} parent=1 // pred_check
      %p123 = pneg %p122
    $region55: #{tpu_custom_call.1} parent=1 // pred_check_branch
      %125 = sbr.rel (%p123) target = $region57
    $region56: #{tpu_custom_call.1} parent=1 // pred_region
      %v126 = vld [vmem:[#allocation5] sm:$0x3]
      %v127 = vlaneseq
      %vm128 = vcmp.ge.s32.totalorder %v127, 0
      %vm129 = vcmp.lt.s32.totalorder %v127, 256
      %vm130 = vmand %vm128, %vm129
      %131 = vst.msk [vmem:[#allocation2] sm:$0x3] %vm130, %v126
    $region57: #{tpu_custom_call.1} parent=1 // pred_fallthru
      _
    %v132 = vld [vmem:[%s120] sm:$0x3]
    %v133 = vunpack.c.l.bf16 %v132
    %v134 = vmax.f32 %v133, 0.0
    %v136 = vperm.slane %v134, 0
    %v137 = vperm.slane %v134, 2
    %v140 = vpack.c.bf16 %v136, %v136
    %v141 = vpack.c.bf16 %v137, %v137
    %v142 = vld [vmem:[#allocation2] sm:$0x3]
    %v143 = vld [vmem:[%s3] sm:$0xff]
    %v144 = vld [vmem:[%s3 + $0x8] sm:$0xff]
    %v145 = vld [vmem:[%s3 + $0x10] sm:$0xff]
    %v146 = vld [vmem:[%s3 + $0x18] sm:$0xff]
    %v147 = vld [vmem:[%s3 + $0x20] sm:$0xff]
    %v148 = vld [vmem:[%s3 + $0x28] sm:$0xff]
    %v149 = vld [vmem:[%s3 + $0x30] sm:$0xff]
    %v150 = vld [vmem:[%s3 + $0x38] sm:$0xff]
    %v151 = vld [vmem:[%s3 + $0x40] sm:$0xff]
    %v152 = vld [vmem:[%s3 + $0x48] sm:$0xff]
    %v153 = vld [vmem:[%s3 + $0x50] sm:$0xff]
    %v154 = vld [vmem:[%s3 + $0x58] sm:$0xff]
    %v155 = vld [vmem:[%s3 + $0x60] sm:$0xff]
    %v156 = vld [vmem:[%s3 + $0x68] sm:$0xff]
    %v157 = vld [vmem:[%s3 + $0x70] sm:$0xff]
    %v158 = vld [vmem:[%s3 + $0x78] sm:$0xff]
    %v159 = vld [vmem:[%s3 + $0x80] sm:$0xff]
    %v160 = vld [vmem:[%s3 + $0x88] sm:$0xff]
    %v161 = vld [vmem:[%s3 + $0x90] sm:$0xff]
    %v162 = vld [vmem:[%s3 + $0x98] sm:$0xff]
    %v163 = vld [vmem:[%s3 + $0xa0] sm:$0xff]
    %v164 = vld [vmem:[%s3 + $0xa8] sm:$0xff]
    %v165 = vld [vmem:[%s3 + $0xb0] sm:$0xff]
    %v166 = vld [vmem:[%s3 + $0xb8] sm:$0xff]
    %v167 = vld [vmem:[%s3 + $0xc0] sm:$0xff]
    %v168 = vld [vmem:[%s3 + $0xc8] sm:$0xff]
    %v169 = vld [vmem:[%s3 + $0xd0] sm:$0xff]
    %v170 = vld [vmem:[%s3 + $0xd8] sm:$0xff]
    %v171 = vld [vmem:[%s3 + $0xe0] sm:$0xff]
    %v172 = vld [vmem:[%s3 + $0xe8] sm:$0xff]
    %v173 = vld [vmem:[%s3 + $0xf0] sm:$0xff]
    %v174 = vld [vmem:[%s3 + $0xf8] sm:$0xff]
    %v175 = vld [vmem:[%s3 + $0x100] sm:$0xff]
    %v176 = vld [vmem:[%s3 + $0x108] sm:$0xff]
    %v177 = vld [vmem:[%s3 + $0x110] sm:$0xff]
    %v178 = vld [vmem:[%s3 + $0x118] sm:$0xff]
    %v179 = vld [vmem:[%s3 + $0x120] sm:$0xff]
    %v180 = vld [vmem:[%s3 + $0x128] sm:$0xff]
    %v181 = vld [vmem:[%s3 + $0x130] sm:$0xff]
    %v182 = vld [vmem:[%s3 + $0x138] sm:$0xff]
    %v183 = vld [vmem:[%s3 + $0x140] sm:$0xff]
    %v184 = vld [vmem:[%s3 + $0x148] sm:$0xff]
    %v185 = vld [vmem:[%s3 + $0x150] sm:$0xff]
    %v186 = vld [vmem:[%s3 + $0x158] sm:$0xff]
    %v187 = vld [vmem:[%s3 + $0x160] sm:$0xff]
    %v188 = vld [vmem:[%s3 + $0x168] sm:$0xff]
    %v189 = vld [vmem:[%s3 + $0x170] sm:$0xff]
    %v190 = vld [vmem:[%s3 + $0x178] sm:$0xff]
    %v191 = vld [vmem:[%s3 + $0x180] sm:$0xff]
    %v192 = vld [vmem:[%s3 + $0x188] sm:$0xff]
    %v193 = vld [vmem:[%s3 + $0x190] sm:$0xff]
    %v194 = vld [vmem:[%s3 + $0x198] sm:$0xff]
    %v195 = vld [vmem:[%s3 + $0x1a0] sm:$0xff]
    %v196 = vld [vmem:[%s3 + $0x1a8] sm:$0xff]
    %v197 = vld [vmem:[%s3 + $0x1b0] sm:$0xff]
    %v198 = vld [vmem:[%s3 + $0x1b8] sm:$0xff]
    %v199 = vld [vmem:[%s3 + $0x1c0] sm:$0xff]
    %v200 = vld [vmem:[%s3 + $0x1c8] sm:$0xff]
    %v201 = vld [vmem:[%s3 + $0x1d0] sm:$0xff]
    %v202 = vld [vmem:[%s3 + $0x1d8] sm:$0xff]
    %v203 = vld [vmem:[%s3 + $0x1e0] sm:$0xff]
    %v204 = vld [vmem:[%s3 + $0x1e8] sm:$0xff]
    %v205 = vld [vmem:[%s3 + $0x1f0] sm:$0xff]
    %v206 = vld [vmem:[%s3 + $0x1f8] sm:$0xff]
    %v207 = vld [vmem:[%s3 + $0x200] sm:$0xff]
    %v208 = vld [vmem:[%s3 + $0x208] sm:$0xff]
    %v209 = vld [vmem:[%s3 + $0x210] sm:$0xff]
    %v210 = vld [vmem:[%s3 + $0x218] sm:$0xff]
    %v211 = vld [vmem:[%s3 + $0x220] sm:$0xff]
    %v212 = vld [vmem:[%s3 + $0x228] sm:$0xff]
    %v213 = vld [vmem:[%s3 + $0x230] sm:$0xff]
    %v214 = vld [vmem:[%s3 + $0x238] sm:$0xff]
    %v215 = vld [vmem:[%s3 + $0x240] sm:$0xff]
    %v216 = vld [vmem:[%s3 + $0x248] sm:$0xff]
    %v217 = vld [vmem:[%s3 + $0x250] sm:$0xff]
    %v218 = vld [vmem:[%s3 + $0x258] sm:$0xff]
    %v219 = vld [vmem:[%s3 + $0x260] sm:$0xff]
    %v220 = vld [vmem:[%s3 + $0x268] sm:$0xff]
    %v221 = vld [vmem:[%s3 + $0x270] sm:$0xff]
    %v222 = vld [vmem:[%s3 + $0x278] sm:$0xff]
    %v223 = vld [vmem:[%s3 + $0x280] sm:$0xff]
    %v224 = vld [vmem:[%s3 + $0x288] sm:$0xff]
    %v225 = vld [vmem:[%s3 + $0x290] sm:$0xff]
    %v226 = vld [vmem:[%s3 + $0x298] sm:$0xff]
    %v227 = vld [vmem:[%s3 + $0x2a0] sm:$0xff]
    %v228 = vld [vmem:[%s3 + $0x2a8] sm:$0xff]
    %v229 = vld [vmem:[%s3 + $0x2b0] sm:$0xff]
    %v230 = vld [vmem:[%s3 + $0x2b8] sm:$0xff]
    %v231 = vld [vmem:[%s3 + $0x2c0] sm:$0xff]
    %v232 = vld [vmem:[%s3 + $0x2c8] sm:$0xff]
    %v233 = vld [vmem:[%s3 + $0x2d0] sm:$0xff]
    %v234 = vld [vmem:[%s3 + $0x2d8] sm:$0xff]
    %v235 = vld [vmem:[%s3 + $0x2e0] sm:$0xff]
    %v236 = vld [vmem:[%s3 + $0x2e8] sm:$0xff]
    %v237 = vld [vmem:[%s3 + $0x2f0] sm:$0xff]
    %v238 = vld [vmem:[%s3 + $0x2f8] sm:$0xff]
    %v239 = vld [vmem:[#allocation8] sm:$0x3f]
    %v336 = vunpack.c.l.b16 %v143
    %v337 = vunpack.c.h.b16 %v143
    %v338 = vunpack.c.l.b16 %v144
    %v339 = vunpack.c.h.b16 %v144
    %v340 = vunpack.c.l.b16 %v145
    %v341 = vunpack.c.h.b16 %v145
    %v342 = vunpack.c.l.b16 %v146
    %v343 = vunpack.c.h.b16 %v146
    %v344 = vunpack.c.l.b16 %v147
    %v345 = vunpack.c.h.b16 %v147
    %v346 = vunpack.c.l.b16 %v148
    %v347 = vunpack.c.h.b16 %v148
    %v348 = vunpack.c.l.b16 %v149
    %v349 = vunpack.c.h.b16 %v149
    %v350 = vunpack.c.l.b16 %v150
    %v351 = vunpack.c.h.b16 %v150
    %v352 = vunpack.c.l.b16 %v151
    %v353 = vunpack.c.h.b16 %v151
    %v354 = vunpack.c.l.b16 %v152
    %v355 = vunpack.c.h.b16 %v152
    %v356 = vunpack.c.l.b16 %v153
    %v357 = vunpack.c.h.b16 %v153
    %v358 = vunpack.c.l.b16 %v154
    %v359 = vunpack.c.h.b16 %v154
    %v360 = vunpack.c.l.b16 %v155
    %v361 = vunpack.c.h.b16 %v155
    %v362 = vunpack.c.l.b16 %v156
    %v363 = vunpack.c.h.b16 %v156
    %v364 = vunpack.c.l.b16 %v157
    %v365 = vunpack.c.h.b16 %v157
    %v366 = vunpack.c.l.b16 %v158
    %v367 = vunpack.c.h.b16 %v158
    %v368 = vunpack.c.l.b16 %v159
    %v369 = vunpack.c.h.b16 %v159
    %v370 = vunpack.c.l.b16 %v160
    %v371 = vunpack.c.h.b16 %v160
    %v372 = vunpack.c.l.b16 %v161
    %v373 = vunpack.c.h.b16 %v161
    %v374 = vunpack.c.l.b16 %v162
    %v375 = vunpack.c.h.b16 %v162
    %v376 = vunpack.c.l.b16 %v163
    %v377 = vunpack.c.h.b16 %v163
    %v378 = vunpack.c.l.b16 %v164
    %v379 = vunpack.c.h.b16 %v164
    %v380 = vunpack.c.l.b16 %v165
    %v381 = vunpack.c.h.b16 %v165
    %v382 = vunpack.c.l.b16 %v166
    %v383 = vunpack.c.h.b16 %v166
    %v384 = vunpack.c.l.b16 %v167
    %v385 = vunpack.c.h.b16 %v167
    %v386 = vunpack.c.l.b16 %v168
    %v387 = vunpack.c.h.b16 %v168
    %v388 = vunpack.c.l.b16 %v169
    %v389 = vunpack.c.h.b16 %v169
    %v390 = vunpack.c.l.b16 %v170
    %v391 = vunpack.c.h.b16 %v170
    %v392 = vunpack.c.l.b16 %v171
    %v393 = vunpack.c.h.b16 %v171
    %v394 = vunpack.c.l.b16 %v172
    %v395 = vunpack.c.h.b16 %v172
    %v396 = vunpack.c.l.b16 %v173
    %v397 = vunpack.c.h.b16 %v173
    %v398 = vunpack.c.l.b16 %v174
    %v399 = vunpack.c.h.b16 %v174
    %v400 = vunpack.c.l.b16 %v175
    %v401 = vunpack.c.h.b16 %v175
    %v402 = vunpack.c.l.b16 %v176
    %v403 = vunpack.c.h.b16 %v176
    %v404 = vunpack.c.l.b16 %v177
    %v405 = vunpack.c.h.b16 %v177
    %v406 = vunpack.c.l.b16 %v178
    %v407 = vunpack.c.h.b16 %v178
    %v408 = vunpack.c.l.b16 %v179
    %v409 = vunpack.c.h.b16 %v179
    %v410 = vunpack.c.l.b16 %v180
    %v411 = vunpack.c.h.b16 %v180
    %v412 = vunpack.c.l.b16 %v181
    %v413 = vunpack.c.h.b16 %v181
    %v414 = vunpack.c.l.b16 %v182
    %v415 = vunpack.c.h.b16 %v182
    %v416 = vunpack.c.l.b16 %v183
    %v417 = vunpack.c.h.b16 %v183
    %v418 = vunpack.c.l.b16 %v184
    %v419 = vunpack.c.h.b16 %v184
    %v420 = vunpack.c.l.b16 %v185
    %v421 = vunpack.c.h.b16 %v185
    %v422 = vunpack.c.l.b16 %v186
    %v423 = vunpack.c.h.b16 %v186
    %v424 = vunpack.c.l.b16 %v187
    %v425 = vunpack.c.h.b16 %v187
    %v426 = vunpack.c.l.b16 %v188
    %v427 = vunpack.c.h.b16 %v188
    %v428 = vunpack.c.l.b16 %v189
    %v429 = vunpack.c.h.b16 %v189
    %v430 = vunpack.c.l.b16 %v190
    %v431 = vunpack.c.h.b16 %v190
    %v432 = vunpack.c.l.b16 %v191
    %v433 = vunpack.c.h.b16 %v191
    %v434 = vunpack.c.l.b16 %v192
    %v435 = vunpack.c.h.b16 %v192
    %v436 = vunpack.c.l.b16 %v193
    %v437 = vunpack.c.h.b16 %v193
    %v438 = vunpack.c.l.b16 %v194
    %v439 = vunpack.c.h.b16 %v194
    %v440 = vunpack.c.l.b16 %v195
    %v441 = vunpack.c.h.b16 %v195
    %v442 = vunpack.c.l.b16 %v196
    %v443 = vunpack.c.h.b16 %v196
    %v444 = vunpack.c.l.b16 %v197
    %v445 = vunpack.c.h.b16 %v197
    %v446 = vunpack.c.l.b16 %v198
    %v447 = vunpack.c.h.b16 %v198
    %v448 = vunpack.c.l.b16 %v199
    %v449 = vunpack.c.h.b16 %v199
    %v450 = vunpack.c.l.b16 %v200
    %v451 = vunpack.c.h.b16 %v200
    %v452 = vunpack.c.l.b16 %v201
    %v453 = vunpack.c.h.b16 %v201
    %v454 = vunpack.c.l.b16 %v202
    %v455 = vunpack.c.h.b16 %v202
    %v456 = vunpack.c.l.b16 %v203
    %v457 = vunpack.c.h.b16 %v203
    %v458 = vunpack.c.l.b16 %v204
    %v459 = vunpack.c.h.b16 %v204
    %v460 = vunpack.c.l.b16 %v205
    %v461 = vunpack.c.h.b16 %v205
    %v462 = vunpack.c.l.b16 %v206
    %v463 = vunpack.c.h.b16 %v206
    %v464 = vunpack.c.l.b16 %v207
    %v465 = vunpack.c.h.b16 %v207
    %v466 = vunpack.c.l.b16 %v208
    %v467 = vunpack.c.h.b16 %v208
    %v468 = vunpack.c.l.b16 %v209
    %v469 = vunpack.c.h.b16 %v209
    %v470 = vunpack.c.l.b16 %v210
    %v471 = vunpack.c.h.b16 %v210
    %v472 = vunpack.c.l.b16 %v211
    %v473 = vunpack.c.h.b16 %v211
    %v474 = vunpack.c.l.b16 %v212
    %v475 = vunpack.c.h.b16 %v212
    %v476 = vunpack.c.l.b16 %v213
    %v477 = vunpack.c.h.b16 %v213
    %v478 = vunpack.c.l.b16 %v214
    %v479 = vunpack.c.h.b16 %v214
    %v480 = vunpack.c.l.b16 %v215
    %v481 = vunpack.c.h.b16 %v215
    %v482 = vunpack.c.l.b16 %v216
    %v483 = vunpack.c.h.b16 %v216
    %v484 = vunpack.c.l.b16 %v217
    %v485 = vunpack.c.h.b16 %v217
    %v486 = vunpack.c.l.b16 %v218
    %v487 = vunpack.c.h.b16 %v218
    %v488 = vunpack.c.l.b16 %v219
    %v489 = vunpack.c.h.b16 %v219
    %v490 = vunpack.c.l.b16 %v220
    %v491 = vunpack.c.h.b16 %v220
    %v492 = vunpack.c.l.b16 %v221
    %v493 = vunpack.c.h.b16 %v221
    %v494 = vunpack.c.l.b16 %v222
    %v495 = vunpack.c.h.b16 %v222
    %v496 = vunpack.c.l.b16 %v223
    %v497 = vunpack.c.h.b16 %v223
    %v498 = vunpack.c.l.b16 %v224
    %v499 = vunpack.c.h.b16 %v224
    %v500 = vunpack.c.l.b16 %v225
    %v501 = vunpack.c.h.b16 %v225
    %v502 = vunpack.c.l.b16 %v226
    %v503 = vunpack.c.h.b16 %v226
    %v504 = vunpack.c.l.b16 %v227
    %v505 = vunpack.c.h.b16 %v227
    %v506 = vunpack.c.l.b16 %v228
    %v507 = vunpack.c.h.b16 %v228
    %v508 = vunpack.c.l.b16 %v229
    %v509 = vunpack.c.h.b16 %v229
    %v510 = vunpack.c.l.b16 %v230
    %v511 = vunpack.c.h.b16 %v230
    %v512 = vunpack.c.l.b16 %v231
    %v513 = vunpack.c.h.b16 %v231
    %v514 = vunpack.c.l.b16 %v232
    %v515 = vunpack.c.h.b16 %v232
    %v516 = vunpack.c.l.b16 %v233
    %v517 = vunpack.c.h.b16 %v233
    %v518 = vunpack.c.l.b16 %v234
    %v519 = vunpack.c.h.b16 %v234
    %v520 = vunpack.c.l.b16 %v235
    %v521 = vunpack.c.h.b16 %v235
    %v522 = vunpack.c.l.b16 %v236
    %v523 = vunpack.c.h.b16 %v236
    %v524 = vunpack.c.l.b16 %v237
    %v525 = vunpack.c.h.b16 %v237
    %v526 = vunpack.c.l.b16 %v238
    %v527 = vunpack.c.h.b16 %v238
    %v528 = vpack.c.b16 %v342, %v336
    %v529 = vpack.c.b16 %v343, %v337
    %v530 = vpack.c.b16 %v344, %v338
    %v531 = vpack.c.b16 %v345, %v339
    %v532 = vpack.c.b16 %v346, %v340
    %v533 = vpack.c.b16 %v347, %v341
    %v534 = vpack.c.b16 %v354, %v348
    %v535 = vpack.c.b16 %v355, %v349
    %v536 = vpack.c.b16 %v356, %v350
    %v537 = vpack.c.b16 %v357, %v351
    %v538 = vpack.c.b16 %v358, %v352
    %v539 = vpack.c.b16 %v359, %v353
    %v540 = vpack.c.b16 %v366, %v360
    %v541 = vpack.c.b16 %v367, %v361
    %v542 = vpack.c.b16 %v368, %v362
    %v543 = vpack.c.b16 %v369, %v363
    %v544 = vpack.c.b16 %v370, %v364
    %v545 = vpack.c.b16 %v371, %v365
    %v546 = vpack.c.b16 %v378, %v372
    %v547 = vpack.c.b16 %v379, %v373
    %v548 = vpack.c.b16 %v380, %v374
    %v549 = vpack.c.b16 %v381, %v375
    %v550 = vpack.c.b16 %v382, %v376
    %v551 = vpack.c.b16 %v383, %v377
    %v552 = vpack.c.b16 %v390, %v384
    %v553 = vpack.c.b16 %v391, %v385
    %v554 = vpack.c.b16 %v392, %v386
    %v555 = vpack.c.b16 %v393, %v387
    %v556 = vpack.c.b16 %v394, %v388
    %v557 = vpack.c.b16 %v395, %v389
    %v558 = vpack.c.b16 %v402, %v396
    %v559 = vpack.c.b16 %v403, %v397
    %v560 = vpack.c.b16 %v404, %v398
    %v561 = vpack.c.b16 %v405, %v399
    %v562 = vpack.c.b16 %v406, %v400
    %v563 = vpack.c.b16 %v407, %v401
    %v564 = vpack.c.b16 %v414, %v408
    %v565 = vpack.c.b16 %v415, %v409
    %v566 = vpack.c.b16 %v416, %v410
    %v567 = vpack.c.b16 %v417, %v411
    %v568 = vpack.c.b16 %v418, %v412
    %v569 = vpack.c.b16 %v419, %v413
    %v570 = vpack.c.b16 %v426, %v420
    %v571 = vpack.c.b16 %v427, %v421
    %v572 = vpack.c.b16 %v428, %v422
    %v573 = vpack.c.b16 %v429, %v423
    %v574 = vpack.c.b16 %v430, %v424
    %v575 = vpack.c.b16 %v431, %v425
    %v576 = vpack.c.b16 %v438, %v432
    %v577 = vpack.c.b16 %v439, %v433
    %v578 = vpack.c.b16 %v440, %v434
    %v579 = vpack.c.b16 %v441, %v435
    %v580 = vpack.c.b16 %v442, %v436
    %v581 = vpack.c.b16 %v443, %v437
    %v582 = vpack.c.b16 %v450, %v444
    %v583 = vpack.c.b16 %v451, %v445
    %v584 = vpack.c.b16 %v452, %v446
    %v585 = vpack.c.b16 %v453, %v447
    %v586 = vpack.c.b16 %v454, %v448
    %v587 = vpack.c.b16 %v455, %v449
    %v588 = vpack.c.b16 %v462, %v456
    %v589 = vpack.c.b16 %v463, %v457
    %v590 = vpack.c.b16 %v464, %v458
    %v591 = vpack.c.b16 %v465, %v459
    %v592 = vpack.c.b16 %v466, %v460
    %v593 = vpack.c.b16 %v467, %v461
    %v594 = vpack.c.b16 %v474, %v468
    %v595 = vpack.c.b16 %v475, %v469
    %v596 = vpack.c.b16 %v476, %v470
    %v597 = vpack.c.b16 %v477, %v471
    %v598 = vpack.c.b16 %v478, %v472
    %v599 = vpack.c.b16 %v479, %v473
    %v600 = vpack.c.b16 %v486, %v480
    %v601 = vpack.c.b16 %v487, %v481
    %v602 = vpack.c.b16 %v488, %v482
    %v603 = vpack.c.b16 %v489, %v483
    %v604 = vpack.c.b16 %v490, %v484
    %v605 = vpack.c.b16 %v491, %v485
    %v606 = vpack.c.b16 %v498, %v492
    %v607 = vpack.c.b16 %v499, %v493
    %v608 = vpack.c.b16 %v500, %v494
    %v609 = vpack.c.b16 %v501, %v495
    %v610 = vpack.c.b16 %v502, %v496
    %v611 = vpack.c.b16 %v503, %v497
    %v612 = vpack.c.b16 %v510, %v504
    %v613 = vpack.c.b16 %v511, %v505
    %v614 = vpack.c.b16 %v512, %v506
    %v615 = vpack.c.b16 %v513, %v507
    %v616 = vpack.c.b16 %v514, %v508
    %v617 = vpack.c.b16 %v515, %v509
    %v618 = vpack.c.b16 %v522, %v516
    %v619 = vpack.c.b16 %v523, %v517
    %v620 = vpack.c.b16 %v524, %v518
    %v621 = vpack.c.b16 %v525, %v519
    %v622 = vpack.c.b16 %v526, %v520
    %v623 = vpack.c.b16 %v527, %v521
    %v721 = vperm.slane %v239, 0
    %v722 = vperm.slane %v239, 1
    %v723 = vperm.slane %v239, 2
    %v724 = vperm.slane %v239, 3
    %v725 = vperm.slane %v239, 4
    %v726 = vperm.slane %v239, 5
    %733 = vmatpush.bf16.msra.mxu0 %v570
    %734 = vmatpush.bf16.msra.mxu0 %v564
    %735 = vmatpush.bf16.msra.mxu0 %v558
    %736 = vmatpush.bf16.msra.mxu0 %v552
    %737 = vmatpush.bf16.msra.mxu0 %v546
    %738 = vmatpush.bf16.msra.mxu0 %v540
    %739 = vmatpush.bf16.msra.mxu0 %v534
    %740 = vmatpush.bf16.msra.mxu0 %v528
    %741 = vmatmul.bf16.gmra.mxu0 %v140
    %v742 = vpop.f32.mrf.mxu0
    %v743 = vadd.f32 %v721, %v742
    %v744 = vpop.f32.mrf.mxu0
    %745 = vdwg.mxu0
    %746 = vmatpush.bf16.msra.mxu0 %v618
    %747 = vmatpush.bf16.msra.mxu0 %v612
    %748 = vmatpush.bf16.msra.mxu0 %v606
    %749 = vmatpush.bf16.msra.mxu0 %v600
    %750 = vmatpush.bf16.msra.mxu0 %v594
    %751 = vmatpush.bf16.msra.mxu0 %v588
    %752 = vmatpush.bf16.msra.mxu0 %v582
    %753 = vmatpush.bf16.msra.mxu0 %v576
    %754 = vmatmul.bf16.gmra.mxu0 %v141
    %v755 = vpop.f32.mrf.mxu0
    %v756 = vadd.f32 %v743, %v755
    %v757 = vpop.f32.mrf.mxu0
    %758 = vdwg.mxu0
    %759 = vmatpush.bf16.msra.mxu0 %v571
    %760 = vmatpush.bf16.msra.mxu0 %v565
    %761 = vmatpush.bf16.msra.mxu0 %v559
    %762 = vmatpush.bf16.msra.mxu0 %v553
    %763 = vmatpush.bf16.msra.mxu0 %v547
    %764 = vmatpush.bf16.msra.mxu0 %v541
    %765 = vmatpush.bf16.msra.mxu0 %v535
    %766 = vmatpush.bf16.msra.mxu0 %v529
    %767 = vmatmul.bf16.gmra.mxu0 %v140
    %v768 = vpop.f32.mrf.mxu0
    %v769 = vadd.f32 %v722, %v768
    %v770 = vpop.f32.mrf.mxu0
    %771 = vdwg.mxu0
    %772 = vmatpush.bf16.msra.mxu0 %v619
    %773 = vmatpush.bf16.msra.mxu0 %v613
    %774 = vmatpush.bf16.msra.mxu0 %v607
    %775 = vmatpush.bf16.msra.mxu0 %v601
    %776 = vmatpush.bf16.msra.mxu0 %v595
    %777 = vmatpush.bf16.msra.mxu0 %v589
    %778 = vmatpush.bf16.msra.mxu0 %v583
    %779 = vmatpush.bf16.msra.mxu0 %v577
    %780 = vmatmul.bf16.gmra.mxu0 %v141
    %v781 = vpop.f32.mrf.mxu0
    %v782 = vadd.f32 %v769, %v781
    %v783 = vpop.f32.mrf.mxu0
    %784 = vdwg.mxu0
    %785 = vmatpush.bf16.msra.mxu0 %v572
    %786 = vmatpush.bf16.msra.mxu0 %v566
    %787 = vmatpush.bf16.msra.mxu0 %v560
    %788 = vmatpush.bf16.msra.mxu0 %v554
    %789 = vmatpush.bf16.msra.mxu0 %v548
    %790 = vmatpush.bf16.msra.mxu0 %v542
    %791 = vmatpush.bf16.msra.mxu0 %v536
    %792 = vmatpush.bf16.msra.mxu0 %v530
    %793 = vmatmul.bf16.gmra.mxu0 %v140
    %v794 = vpop.f32.mrf.mxu0
    %v795 = vadd.f32 %v723, %v794
    %v796 = vpop.f32.mrf.mxu0
    %797 = vdwg.mxu0
    %798 = vmatpush.bf16.msra.mxu0 %v620
    %799 = vmatpush.bf16.msra.mxu0 %v614
    %800 = vmatpush.bf16.msra.mxu0 %v608
    %801 = vmatpush.bf16.msra.mxu0 %v602
    %802 = vmatpush.bf16.msra.mxu0 %v596
    %803 = vmatpush.bf16.msra.mxu0 %v590
    %804 = vmatpush.bf16.msra.mxu0 %v584
    %805 = vmatpush.bf16.msra.mxu0 %v578
    %806 = vmatmul.bf16.gmra.mxu0 %v141
    %v807 = vpop.f32.mrf.mxu0
    %v808 = vadd.f32 %v795, %v807
    %v809 = vpop.f32.mrf.mxu0
    %810 = vdwg.mxu0
    %811 = vmatpush.bf16.msra.mxu0 %v573
    %812 = vmatpush.bf16.msra.mxu0 %v567
    %813 = vmatpush.bf16.msra.mxu0 %v561
    %814 = vmatpush.bf16.msra.mxu0 %v555
    %815 = vmatpush.bf16.msra.mxu0 %v549
    %816 = vmatpush.bf16.msra.mxu0 %v543
    %817 = vmatpush.bf16.msra.mxu0 %v537
    %818 = vmatpush.bf16.msra.mxu0 %v531
    %819 = vmatmul.bf16.gmra.mxu0 %v140
    %v820 = vpop.f32.mrf.mxu0
    %v821 = vadd.f32 %v724, %v820
    %v822 = vpop.f32.mrf.mxu0
    %823 = vdwg.mxu0
    %824 = vmatpush.bf16.msra.mxu0 %v621
    %825 = vmatpush.bf16.msra.mxu0 %v615
    %826 = vmatpush.bf16.msra.mxu0 %v609
    %827 = vmatpush.bf16.msra.mxu0 %v603
    %828 = vmatpush.bf16.msra.mxu0 %v597
    %829 = vmatpush.bf16.msra.mxu0 %v591
    %830 = vmatpush.bf16.msra.mxu0 %v585
    %831 = vmatpush.bf16.msra.mxu0 %v579
    %832 = vmatmul.bf16.gmra.mxu0 %v141
    %v833 = vpop.f32.mrf.mxu0
    %v834 = vadd.f32 %v821, %v833
    %v835 = vpop.f32.mrf.mxu0
    %836 = vdwg.mxu0
    %837 = vmatpush.bf16.msra.mxu0 %v574
    %838 = vmatpush.bf16.msra.mxu0 %v568
    %839 = vmatpush.bf16.msra.mxu0 %v562
    %840 = vmatpush.bf16.msra.mxu0 %v556
    %841 = vmatpush.bf16.msra.mxu0 %v550
    %842 = vmatpush.bf16.msra.mxu0 %v544
    %843 = vmatpush.bf16.msra.mxu0 %v538
    %844 = vmatpush.bf16.msra.mxu0 %v532
    %845 = vmatmul.bf16.gmra.mxu0 %v140
    %v846 = vpop.f32.mrf.mxu0
    %v847 = vadd.f32 %v725, %v846
    %v848 = vpop.f32.mrf.mxu0
    %849 = vdwg.mxu0
    %850 = vmatpush.bf16.msra.mxu0 %v622
    %851 = vmatpush.bf16.msra.mxu0 %v616
    %852 = vmatpush.bf16.msra.mxu0 %v610
    %853 = vmatpush.bf16.msra.mxu0 %v604
    %854 = vmatpush.bf16.msra.mxu0 %v598
    %855 = vmatpush.bf16.msra.mxu0 %v592
    %856 = vmatpush.bf16.msra.mxu0 %v586
    %857 = vmatpush.bf16.msra.mxu0 %v580
    %858 = vmatmul.bf16.gmra.mxu0 %v141
    %v859 = vpop.f32.mrf.mxu0
    %v860 = vadd.f32 %v847, %v859
    %v861 = vpop.f32.mrf.mxu0
    %862 = vdwg.mxu0
    %863 = vmatpush.bf16.msra.mxu0 %v575
    %864 = vmatpush.bf16.msra.mxu0 %v569
    %865 = vmatpush.bf16.msra.mxu0 %v563
    %866 = vmatpush.bf16.msra.mxu0 %v557
    %867 = vmatpush.bf16.msra.mxu0 %v551
    %868 = vmatpush.bf16.msra.mxu0 %v545
    %869 = vmatpush.bf16.msra.mxu0 %v539
    %870 = vmatpush.bf16.msra.mxu0 %v533
    %871 = vmatmul.bf16.gmra.mxu0 %v140
    %v872 = vpop.f32.mrf.mxu0
    %v873 = vadd.f32 %v726, %v872
    %v874 = vpop.f32.mrf.mxu0
    %875 = vdwg.mxu0
    %876 = vmatpush.bf16.msra.mxu0 %v623
    %877 = vmatpush.bf16.msra.mxu0 %v617
    %878 = vmatpush.bf16.msra.mxu0 %v611
    %879 = vmatpush.bf16.msra.mxu0 %v605
    %880 = vmatpush.bf16.msra.mxu0 %v599
    %881 = vmatpush.bf16.msra.mxu0 %v593
    %882 = vmatpush.bf16.msra.mxu0 %v587
    %883 = vmatpush.bf16.msra.mxu0 %v581
    %884 = vmatmul.bf16.gmra.mxu0 %v141
    %v885 = vpop.f32.mrf.mxu0
    %v886 = vadd.f32 %v873, %v885
    %v887 = vpop.f32.mrf.mxu0
    %888 = vdwg.mxu0
    %v890 = vperm.slane %v142, 0
    %v891 = vperm.slane %v142, 1
    %v894 = vpack.c.bf16 %v890, %v890
    %v895 = vpack.c.bf16 %v891, %v891
    %v896 = vld [vmem:[%s4] sm:$0xff]
    %v897 = vld [vmem:[%s4 + $0x8] sm:$0xff]
    %v898 = vld [vmem:[%s4 + $0x10] sm:$0xff]
    %v899 = vld [vmem:[%s4 + $0x18] sm:$0xff]
    %v900 = vld [vmem:[%s4 + $0x20] sm:$0xff]
    %v901 = vld [vmem:[%s4 + $0x28] sm:$0xff]
    %v902 = vld [vmem:[%s4 + $0x30] sm:$0xff]
    %v903 = vld [vmem:[%s4 + $0x38] sm:$0xff]
    %v904 = vld [vmem:[%s4 + $0x40] sm:$0xff]
    %v905 = vld [vmem:[%s4 + $0x48] sm:$0xff]
    %v906 = vld [vmem:[%s4 + $0x50] sm:$0xff]
    %v907 = vld [vmem:[%s4 + $0x58] sm:$0xff]
    %v908 = vld [vmem:[%s4 + $0x60] sm:$0xff]
    %v909 = vld [vmem:[%s4 + $0x68] sm:$0xff]
    %v910 = vld [vmem:[%s4 + $0x70] sm:$0xff]
    %v911 = vld [vmem:[%s4 + $0x78] sm:$0xff]
    %v912 = vld [vmem:[%s4 + $0x80] sm:$0xff]
    %v913 = vld [vmem:[%s4 + $0x88] sm:$0xff]
    %v914 = vld [vmem:[%s4 + $0x90] sm:$0xff]
    %v915 = vld [vmem:[%s4 + $0x98] sm:$0xff]
    %v916 = vld [vmem:[%s4 + $0xa0] sm:$0xff]
    %v917 = vld [vmem:[%s4 + $0xa8] sm:$0xff]
    %v918 = vld [vmem:[%s4 + $0xb0] sm:$0xff]
    %v919 = vld [vmem:[%s4 + $0xb8] sm:$0xff]
    %v920 = vld [vmem:[%s4 + $0xc0] sm:$0xff]
    %v921 = vld [vmem:[%s4 + $0xc8] sm:$0xff]
    %v922 = vld [vmem:[%s4 + $0xd0] sm:$0xff]
    %v923 = vld [vmem:[%s4 + $0xd8] sm:$0xff]
    %v924 = vld [vmem:[%s4 + $0xe0] sm:$0xff]
    %v925 = vld [vmem:[%s4 + $0xe8] sm:$0xff]
    %v926 = vld [vmem:[%s4 + $0xf0] sm:$0xff]
    %v927 = vld [vmem:[%s4 + $0xf8] sm:$0xff]
    %v928 = vld [vmem:[%s4 + $0x100] sm:$0xff]
    %v929 = vld [vmem:[%s4 + $0x108] sm:$0xff]
    %v930 = vld [vmem:[%s4 + $0x110] sm:$0xff]
    %v931 = vld [vmem:[%s4 + $0x118] sm:$0xff]
    %v932 = vld [vmem:[%s4 + $0x120] sm:$0xff]
    %v933 = vld [vmem:[%s4 + $0x128] sm:$0xff]
    %v934 = vld [vmem:[%s4 + $0x130] sm:$0xff]
    %v935 = vld [vmem:[%s4 + $0x138] sm:$0xff]
    %v936 = vld [vmem:[%s4 + $0x140] sm:$0xff]
    %v937 = vld [vmem:[%s4 + $0x148] sm:$0xff]
    %v938 = vld [vmem:[%s4 + $0x150] sm:$0xff]
    %v939 = vld [vmem:[%s4 + $0x158] sm:$0xff]
    %v940 = vld [vmem:[%s4 + $0x160] sm:$0xff]
    %v941 = vld [vmem:[%s4 + $0x168] sm:$0xff]
    %v942 = vld [vmem:[%s4 + $0x170] sm:$0xff]
    %v943 = vld [vmem:[%s4 + $0x178] sm:$0xff]
    %v944 = vld [vmem:[%s4 + $0x180] sm:$0xff]
    %v945 = vld [vmem:[%s4 + $0x188] sm:$0xff]
    %v946 = vld [vmem:[%s4 + $0x190] sm:$0xff]
    %v947 = vld [vmem:[%s4 + $0x198] sm:$0xff]
    %v948 = vld [vmem:[%s4 + $0x1a0] sm:$0xff]
    %v949 = vld [vmem:[%s4 + $0x1a8] sm:$0xff]
    %v950 = vld [vmem:[%s4 + $0x1b0] sm:$0xff]
    %v951 = vld [vmem:[%s4 + $0x1b8] sm:$0xff]
    %v952 = vld [vmem:[%s4 + $0x1c0] sm:$0xff]
    %v953 = vld [vmem:[%s4 + $0x1c8] sm:$0xff]
    %v954 = vld [vmem:[%s4 + $0x1d0] sm:$0xff]
    %v955 = vld [vmem:[%s4 + $0x1d8] sm:$0xff]
    %v956 = vld [vmem:[%s4 + $0x1e0] sm:$0xff]
    %v957 = vld [vmem:[%s4 + $0x1e8] sm:$0xff]
    %v958 = vld [vmem:[%s4 + $0x1f0] sm:$0xff]
    %v959 = vld [vmem:[%s4 + $0x1f8] sm:$0xff]
    %v960 = vld [vmem:[%s4 + $0x200] sm:$0xff]
    %v961 = vld [vmem:[%s4 + $0x208] sm:$0xff]
    %v962 = vld [vmem:[%s4 + $0x210] sm:$0xff]
    %v963 = vld [vmem:[%s4 + $0x218] sm:$0xff]
    %v964 = vld [vmem:[%s4 + $0x220] sm:$0xff]
    %v965 = vld [vmem:[%s4 + $0x228] sm:$0xff]
    %v966 = vld [vmem:[%s4 + $0x230] sm:$0xff]
    %v967 = vld [vmem:[%s4 + $0x238] sm:$0xff]
    %v968 = vld [vmem:[%s4 + $0x240] sm:$0xff]
    %v969 = vld [vmem:[%s4 + $0x248] sm:$0xff]
    %v970 = vld [vmem:[%s4 + $0x250] sm:$0xff]
    %v971 = vld [vmem:[%s4 + $0x258] sm:$0xff]
    %v972 = vld [vmem:[%s4 + $0x260] sm:$0xff]
    %v973 = vld [vmem:[%s4 + $0x268] sm:$0xff]
    %v974 = vld [vmem:[%s4 + $0x270] sm:$0xff]
    %v975 = vld [vmem:[%s4 + $0x278] sm:$0xff]
    %v976 = vld [vmem:[%s4 + $0x280] sm:$0xff]
    %v977 = vld [vmem:[%s4 + $0x288] sm:$0xff]
    %v978 = vld [vmem:[%s4 + $0x290] sm:$0xff]
    %v979 = vld [vmem:[%s4 + $0x298] sm:$0xff]
    %v980 = vld [vmem:[%s4 + $0x2a0] sm:$0xff]
    %v981 = vld [vmem:[%s4 + $0x2a8] sm:$0xff]
    %v982 = vld [vmem:[%s4 + $0x2b0] sm:$0xff]
    %v983 = vld [vmem:[%s4 + $0x2b8] sm:$0xff]
    %v984 = vld [vmem:[%s4 + $0x2c0] sm:$0xff]
    %v985 = vld [vmem:[%s4 + $0x2c8] sm:$0xff]
    %v986 = vld [vmem:[%s4 + $0x2d0] sm:$0xff]
    %v987 = vld [vmem:[%s4 + $0x2d8] sm:$0xff]
    %v988 = vld [vmem:[%s4 + $0x2e0] sm:$0xff]
    %v989 = vld [vmem:[%s4 + $0x2e8] sm:$0xff]
    %v990 = vld [vmem:[%s4 + $0x2f0] sm:$0xff]
    %v991 = vld [vmem:[%s4 + $0x2f8] sm:$0xff]
    %v1088 = vunpack.c.l.b16 %v896
    %v1089 = vunpack.c.h.b16 %v896
    %v1090 = vunpack.c.l.b16 %v897
    %v1091 = vunpack.c.h.b16 %v897
    %v1092 = vunpack.c.l.b16 %v898
    %v1093 = vunpack.c.h.b16 %v898
    %v1094 = vunpack.c.l.b16 %v899
    %v1095 = vunpack.c.h.b16 %v899
    %v1096 = vunpack.c.l.b16 %v900
    %v1097 = vunpack.c.h.b16 %v900
    %v1098 = vunpack.c.l.b16 %v901
    %v1099 = vunpack.c.h.b16 %v901
    %v1100 = vunpack.c.l.b16 %v902
    %v1101 = vunpack.c.h.b16 %v902
    %v1102 = vunpack.c.l.b16 %v903
    %v1103 = vunpack.c.h.b16 %v903
    %v1104 = vunpack.c.l.b16 %v904
    %v1105 = vunpack.c.h.b16 %v904
    %v1106 = vunpack.c.l.b16 %v905
    %v1107 = vunpack.c.h.b16 %v905
    %v1108 = vunpack.c.l.b16 %v906
    %v1109 = vunpack.c.h.b16 %v906
    %v1110 = vunpack.c.l.b16 %v907
    %v1111 = vunpack.c.h.b16 %v907
    %v1112 = vunpack.c.l.b16 %v908
    %v1113 = vunpack.c.h.b16 %v908
    %v1114 = vunpack.c.l.b16 %v909
    %v1115 = vunpack.c.h.b16 %v909
    %v1116 = vunpack.c.l.b16 %v910
    %v1117 = vunpack.c.h.b16 %v910
    %v1118 = vunpack.c.l.b16 %v911
    %v1119 = vunpack.c.h.b16 %v911
    %v1120 = vunpack.c.l.b16 %v912
    %v1121 = vunpack.c.h.b16 %v912
    %v1122 = vunpack.c.l.b16 %v913
    %v1123 = vunpack.c.h.b16 %v913
    %v1124 = vunpack.c.l.b16 %v914
    %v1125 = vunpack.c.h.b16 %v914
    %v1126 = vunpack.c.l.b16 %v915
    %v1127 = vunpack.c.h.b16 %v915
    %v1128 = vunpack.c.l.b16 %v916
    %v1129 = vunpack.c.h.b16 %v916
    %v1130 = vunpack.c.l.b16 %v917
    %v1131 = vunpack.c.h.b16 %v917
    %v1132 = vunpack.c.l.b16 %v918
    %v1133 = vunpack.c.h.b16 %v918
    %v1134 = vunpack.c.l.b16 %v919
    %v1135 = vunpack.c.h.b16 %v919
    %v1136 = vunpack.c.l.b16 %v920
    %v1137 = vunpack.c.h.b16 %v920
    %v1138 = vunpack.c.l.b16 %v921
    %v1139 = vunpack.c.h.b16 %v921
    %v1140 = vunpack.c.l.b16 %v922
    %v1141 = vunpack.c.h.b16 %v922
    %v1142 = vunpack.c.l.b16 %v923
    %v1143 = vunpack.c.h.b16 %v923
    %v1144 = vunpack.c.l.b16 %v924
    %v1145 = vunpack.c.h.b16 %v924
    %v1146 = vunpack.c.l.b16 %v925
    %v1147 = vunpack.c.h.b16 %v925
    %v1148 = vunpack.c.l.b16 %v926
    %v1149 = vunpack.c.h.b16 %v926
    %v1150 = vunpack.c.l.b16 %v927
    %v1151 = vunpack.c.h.b16 %v927
    %v1152 = vunpack.c.l.b16 %v928
    %v1153 = vunpack.c.h.b16 %v928
    %v1154 = vunpack.c.l.b16 %v929
    %v1155 = vunpack.c.h.b16 %v929
    %v1156 = vunpack.c.l.b16 %v930
    %v1157 = vunpack.c.h.b16 %v930
    %v1158 = vunpack.c.l.b16 %v931
    %v1159 = vunpack.c.h.b16 %v931
    %v1160 = vunpack.c.l.b16 %v932
    %v1161 = vunpack.c.h.b16 %v932
    %v1162 = vunpack.c.l.b16 %v933
    %v1163 = vunpack.c.h.b16 %v933
    %v1164 = vunpack.c.l.b16 %v934
    %v1165 = vunpack.c.h.b16 %v934
    %v1166 = vunpack.c.l.b16 %v935
    %v1167 = vunpack.c.h.b16 %v935
    %v1168 = vunpack.c.l.b16 %v936
    %v1169 = vunpack.c.h.b16 %v936
    %v1170 = vunpack.c.l.b16 %v937
    %v1171 = vunpack.c.h.b16 %v937
    %v1172 = vunpack.c.l.b16 %v938
    %v1173 = vunpack.c.h.b16 %v938
    %v1174 = vunpack.c.l.b16 %v939
    %v1175 = vunpack.c.h.b16 %v939
    %v1176 = vunpack.c.l.b16 %v940
    %v1177 = vunpack.c.h.b16 %v940
    %v1178 = vunpack.c.l.b16 %v941
    %v1179 = vunpack.c.h.b16 %v941
    %v1180 = vunpack.c.l.b16 %v942
    %v1181 = vunpack.c.h.b16 %v942
    %v1182 = vunpack.c.l.b16 %v943
    %v1183 = vunpack.c.h.b16 %v943
    %v1184 = vunpack.c.l.b16 %v944
    %v1185 = vunpack.c.h.b16 %v944
    %v1186 = vunpack.c.l.b16 %v945
    %v1187 = vunpack.c.h.b16 %v945
    %v1188 = vunpack.c.l.b16 %v946
    %v1189 = vunpack.c.h.b16 %v946
    %v1190 = vunpack.c.l.b16 %v947
    %v1191 = vunpack.c.h.b16 %v947
    %v1192 = vunpack.c.l.b16 %v948
    %v1193 = vunpack.c.h.b16 %v948
    %v1194 = vunpack.c.l.b16 %v949
    %v1195 = vunpack.c.h.b16 %v949
    %v1196 = vunpack.c.l.b16 %v950
    %v1197 = vunpack.c.h.b16 %v950
    %v1198 = vunpack.c.l.b16 %v951
    %v1199 = vunpack.c.h.b16 %v951
    %v1200 = vunpack.c.l.b16 %v952
    %v1201 = vunpack.c.h.b16 %v952
    %v1202 = vunpack.c.l.b16 %v953
    %v1203 = vunpack.c.h.b16 %v953
    %v1204 = vunpack.c.l.b16 %v954
    %v1205 = vunpack.c.h.b16 %v954
    %v1206 = vunpack.c.l.b16 %v955
    %v1207 = vunpack.c.h.b16 %v955
    %v1208 = vunpack.c.l.b16 %v956
    %v1209 = vunpack.c.h.b16 %v956
    %v1210 = vunpack.c.l.b16 %v957
    %v1211 = vunpack.c.h.b16 %v957
    %v1212 = vunpack.c.l.b16 %v958
    %v1213 = vunpack.c.h.b16 %v958
    %v1214 = vunpack.c.l.b16 %v959
    %v1215 = vunpack.c.h.b16 %v959
    %v1216 = vunpack.c.l.b16 %v960
    %v1217 = vunpack.c.h.b16 %v960
    %v1218 = vunpack.c.l.b16 %v961
    %v1219 = vunpack.c.h.b16 %v961
    %v1220 = vunpack.c.l.b16 %v962
    %v1221 = vunpack.c.h.b16 %v962
    %v1222 = vunpack.c.l.b16 %v963
    %v1223 = vunpack.c.h.b16 %v963
    %v1224 = vunpack.c.l.b16 %v964
    %v1225 = vunpack.c.h.b16 %v964
    %v1226 = vunpack.c.l.b16 %v965
    %v1227 = vunpack.c.h.b16 %v965
    %v1228 = vunpack.c.l.b16 %v966
    %v1229 = vunpack.c.h.b16 %v966
    %v1230 = vunpack.c.l.b16 %v967
    %v1231 = vunpack.c.h.b16 %v967
    %v1232 = vunpack.c.l.b16 %v968
    %v1233 = vunpack.c.h.b16 %v968
    %v1234 = vunpack.c.l.b16 %v969
    %v1235 = vunpack.c.h.b16 %v969
    %v1236 = vunpack.c.l.b16 %v970
    %v1237 = vunpack.c.h.b16 %v970
    %v1238 = vunpack.c.l.b16 %v971
    %v1239 = vunpack.c.h.b16 %v971
    %v1240 = vunpack.c.l.b16 %v972
    %v1241 = vunpack.c.h.b16 %v972
    %v1242 = vunpack.c.l.b16 %v973
    %v1243 = vunpack.c.h.b16 %v973
    %v1244 = vunpack.c.l.b16 %v974
    %v1245 = vunpack.c.h.b16 %v974
    %v1246 = vunpack.c.l.b16 %v975
    %v1247 = vunpack.c.h.b16 %v975
    %v1248 = vunpack.c.l.b16 %v976
    %v1249 = vunpack.c.h.b16 %v976
    %v1250 = vunpack.c.l.b16 %v977
    %v1251 = vunpack.c.h.b16 %v977
    %v1252 = vunpack.c.l.b16 %v978
    %v1253 = vunpack.c.h.b16 %v978
    %v1254 = vunpack.c.l.b16 %v979
    %v1255 = vunpack.c.h.b16 %v979
    %v1256 = vunpack.c.l.b16 %v980
    %v1257 = vunpack.c.h.b16 %v980
    %v1258 = vunpack.c.l.b16 %v981
    %v1259 = vunpack.c.h.b16 %v981
    %v1260 = vunpack.c.l.b16 %v982
    %v1261 = vunpack.c.h.b16 %v982
    %v1262 = vunpack.c.l.b16 %v983
    %v1263 = vunpack.c.h.b16 %v983
    %v1264 = vunpack.c.l.b16 %v984
    %v1265 = vunpack.c.h.b16 %v984
    %v1266 = vunpack.c.l.b16 %v985
    %v1267 = vunpack.c.h.b16 %v985
    %v1268 = vunpack.c.l.b16 %v986
    %v1269 = vunpack.c.h.b16 %v986
    %v1270 = vunpack.c.l.b16 %v987
    %v1271 = vunpack.c.h.b16 %v987
    %v1272 = vunpack.c.l.b16 %v988
    %v1273 = vunpack.c.h.b16 %v988
    %v1274 = vunpack.c.l.b16 %v989
    %v1275 = vunpack.c.h.b16 %v989
    %v1276 = vunpack.c.l.b16 %v990
    %v1277 = vunpack.c.h.b16 %v990
    %v1278 = vunpack.c.l.b16 %v991
    %v1279 = vunpack.c.h.b16 %v991
    %v1280 = vpack.c.b16 %v1094, %v1088
    %v1281 = vpack.c.b16 %v1095, %v1089
    %v1282 = vpack.c.b16 %v1096, %v1090
    %v1283 = vpack.c.b16 %v1097, %v1091
    %v1284 = vpack.c.b16 %v1098, %v1092
    %v1285 = vpack.c.b16 %v1099, %v1093
    %v1286 = vpack.c.b16 %v1106, %v1100
    %v1287 = vpack.c.b16 %v1107, %v1101
    %v1288 = vpack.c.b16 %v1108, %v1102
    %v1289 = vpack.c.b16 %v1109, %v1103
    %v1290 = vpack.c.b16 %v1110, %v1104
    %v1291 = vpack.c.b16 %v1111, %v1105
    %v1292 = vpack.c.b16 %v1118, %v1112
    %v1293 = vpack.c.b16 %v1119, %v1113
    %v1294 = vpack.c.b16 %v1120, %v1114
    %v1295 = vpack.c.b16 %v1121, %v1115
    %v1296 = vpack.c.b16 %v1122, %v1116
    %v1297 = vpack.c.b16 %v1123, %v1117
    %v1298 = vpack.c.b16 %v1130, %v1124
    %v1299 = vpack.c.b16 %v1131, %v1125
    %v1300 = vpack.c.b16 %v1132, %v1126
    %v1301 = vpack.c.b16 %v1133, %v1127
    %v1302 = vpack.c.b16 %v1134, %v1128
    %v1303 = vpack.c.b16 %v1135, %v1129
    %v1304 = vpack.c.b16 %v1142, %v1136
    %v1305 = vpack.c.b16 %v1143, %v1137
    %v1306 = vpack.c.b16 %v1144, %v1138
    %v1307 = vpack.c.b16 %v1145, %v1139
    %v1308 = vpack.c.b16 %v1146, %v1140
    %v1309 = vpack.c.b16 %v1147, %v1141
    %v1310 = vpack.c.b16 %v1154, %v1148
    %v1311 = vpack.c.b16 %v1155, %v1149
    %v1312 = vpack.c.b16 %v1156, %v1150
    %v1313 = vpack.c.b16 %v1157, %v1151
    %v1314 = vpack.c.b16 %v1158, %v1152
    %v1315 = vpack.c.b16 %v1159, %v1153
    %v1316 = vpack.c.b16 %v1166, %v1160
    %v1317 = vpack.c.b16 %v1167, %v1161
    %v1318 = vpack.c.b16 %v1168, %v1162
    %v1319 = vpack.c.b16 %v1169, %v1163
    %v1320 = vpack.c.b16 %v1170, %v1164
    %v1321 = vpack.c.b16 %v1171, %v1165
    %v1322 = vpack.c.b16 %v1178, %v1172
    %v1323 = vpack.c.b16 %v1179, %v1173
    %v1324 = vpack.c.b16 %v1180, %v1174
    %v1325 = vpack.c.b16 %v1181, %v1175
    %v1326 = vpack.c.b16 %v1182, %v1176
    %v1327 = vpack.c.b16 %v1183, %v1177
    %v1328 = vpack.c.b16 %v1190, %v1184
    %v1329 = vpack.c.b16 %v1191, %v1185
    %v1330 = vpack.c.b16 %v1192, %v1186
    %v1331 = vpack.c.b16 %v1193, %v1187
    %v1332 = vpack.c.b16 %v1194, %v1188
    %v1333 = vpack.c.b16 %v1195, %v1189
    %v1334 = vpack.c.b16 %v1202, %v1196
    %v1335 = vpack.c.b16 %v1203, %v1197
    %v1336 = vpack.c.b16 %v1204, %v1198
    %v1337 = vpack.c.b16 %v1205, %v1199
    %v1338 = vpack.c.b16 %v1206, %v1200
    %v1339 = vpack.c.b16 %v1207, %v1201
    %v1340 = vpack.c.b16 %v1214, %v1208
    %v1341 = vpack.c.b16 %v1215, %v1209
    %v1342 = vpack.c.b16 %v1216, %v1210
    %v1343 = vpack.c.b16 %v1217, %v1211
    %v1344 = vpack.c.b16 %v1218, %v1212
    %v1345 = vpack.c.b16 %v1219, %v1213
    %v1346 = vpack.c.b16 %v1226, %v1220
    %v1347 = vpack.c.b16 %v1227, %v1221
    %v1348 = vpack.c.b16 %v1228, %v1222
    %v1349 = vpack.c.b16 %v1229, %v1223
    %v1350 = vpack.c.b16 %v1230, %v1224
    %v1351 = vpack.c.b16 %v1231, %v1225
    %v1352 = vpack.c.b16 %v1238, %v1232
    %v1353 = vpack.c.b16 %v1239, %v1233
    %v1354 = vpack.c.b16 %v1240, %v1234
    %v1355 = vpack.c.b16 %v1241, %v1235
    %v1356 = vpack.c.b16 %v1242, %v1236
    %v1357 = vpack.c.b16 %v1243, %v1237
    %v1358 = vpack.c.b16 %v1250, %v1244
    %v1359 = vpack.c.b16 %v1251, %v1245
    %v1360 = vpack.c.b16 %v1252, %v1246
    %v1361 = vpack.c.b16 %v1253, %v1247
    %v1362 = vpack.c.b16 %v1254, %v1248
    %v1363 = vpack.c.b16 %v1255, %v1249
    %v1364 = vpack.c.b16 %v1262, %v1256
    %v1365 = vpack.c.b16 %v1263, %v1257
    %v1366 = vpack.c.b16 %v1264, %v1258
    %v1367 = vpack.c.b16 %v1265, %v1259
    %v1368 = vpack.c.b16 %v1266, %v1260
    %v1369 = vpack.c.b16 %v1267, %v1261
    %v1370 = vpack.c.b16 %v1274, %v1268
    %v1371 = vpack.c.b16 %v1275, %v1269
    %v1372 = vpack.c.b16 %v1276, %v1270
    %v1373 = vpack.c.b16 %v1277, %v1271
    %v1374 = vpack.c.b16 %v1278, %v1272
    %v1375 = vpack.c.b16 %v1279, %v1273
    %1472 = vmatpush.bf16.msra.mxu0 %v1322
    %1473 = vmatpush.bf16.msra.mxu0 %v1316
    %1474 = vmatpush.bf16.msra.mxu0 %v1310
    %1475 = vmatpush.bf16.msra.mxu0 %v1304
    %1476 = vmatpush.bf16.msra.mxu0 %v1298
    %1477 = vmatpush.bf16.msra.mxu0 %v1292
    %1478 = vmatpush.bf16.msra.mxu0 %v1286
    %1479 = vmatpush.bf16.msra.mxu0 %v1280
    %1480 = vmatmul.bf16.gmra.mxu0 %v894
    %v1481 = vpop.f32.mrf.mxu0
    %v1482 = vadd.f32 0.0, %v1481
    %v1483 = vpop.f32.mrf.mxu0
    %1484 = vdwg.mxu0
    %1485 = vmatpush.bf16.msra.mxu0 %v1370
    %1486 = vmatpush.bf16.msra.mxu0 %v1364
    %1487 = vmatpush.bf16.msra.mxu0 %v1358
    %1488 = vmatpush.bf16.msra.mxu0 %v1352
    %1489 = vmatpush.bf16.msra.mxu0 %v1346
    %1490 = vmatpush.bf16.msra.mxu0 %v1340
    %1491 = vmatpush.bf16.msra.mxu0 %v1334
    %1492 = vmatpush.bf16.msra.mxu0 %v1328
    %1493 = vmatmul.bf16.gmra.mxu0 %v895
    %v1494 = vpop.f32.mrf.mxu0
    %v1495 = vadd.f32 %v1482, %v1494
    %v1496 = vpop.f32.mrf.mxu0
    %1497 = vdwg.mxu0
    %1498 = vmatpush.bf16.msra.mxu0 %v1323
    %1499 = vmatpush.bf16.msra.mxu0 %v1317
    %1500 = vmatpush.bf16.msra.mxu0 %v1311
    %1501 = vmatpush.bf16.msra.mxu0 %v1305
    %1502 = vmatpush.bf16.msra.mxu0 %v1299
    %1503 = vmatpush.bf16.msra.mxu0 %v1293
    %1504 = vmatpush.bf16.msra.mxu0 %v1287
    %1505 = vmatpush.bf16.msra.mxu0 %v1281
    %1506 = vmatmul.bf16.gmra.mxu0 %v894
    %v1507 = vpop.f32.mrf.mxu0
    %v1508 = vadd.f32 0.0, %v1507
    %v1509 = vpop.f32.mrf.mxu0
    %1510 = vdwg.mxu0
    %1511 = vmatpush.bf16.msra.mxu0 %v1371
    %1512 = vmatpush.bf16.msra.mxu0 %v1365
    %1513 = vmatpush.bf16.msra.mxu0 %v1359
    %1514 = vmatpush.bf16.msra.mxu0 %v1353
    %1515 = vmatpush.bf16.msra.mxu0 %v1347
    %1516 = vmatpush.bf16.msra.mxu0 %v1341
    %1517 = vmatpush.bf16.msra.mxu0 %v1335
    %1518 = vmatpush.bf16.msra.mxu0 %v1329
    %1519 = vmatmul.bf16.gmra.mxu0 %v895
    %v1520 = vpop.f32.mrf.mxu0
    %v1521 = vadd.f32 %v1508, %v1520
    %v1522 = vpop.f32.mrf.mxu0
    %1523 = vdwg.mxu0
    %1524 = vmatpush.bf16.msra.mxu0 %v1324
    %1525 = vmatpush.bf16.msra.mxu0 %v1318
    %1526 = vmatpush.bf16.msra.mxu0 %v1312
    %1527 = vmatpush.bf16.msra.mxu0 %v1306
    %1528 = vmatpush.bf16.msra.mxu0 %v1300
    %1529 = vmatpush.bf16.msra.mxu0 %v1294
    %1530 = vmatpush.bf16.msra.mxu0 %v1288
    %1531 = vmatpush.bf16.msra.mxu0 %v1282
    %1532 = vmatmul.bf16.gmra.mxu0 %v894
    %v1533 = vpop.f32.mrf.mxu0
    %v1534 = vadd.f32 0.0, %v1533
    %v1535 = vpop.f32.mrf.mxu0
    %1536 = vdwg.mxu0
    %1537 = vmatpush.bf16.msra.mxu0 %v1372
    %1538 = vmatpush.bf16.msra.mxu0 %v1366
    %1539 = vmatpush.bf16.msra.mxu0 %v1360
    %1540 = vmatpush.bf16.msra.mxu0 %v1354
    %1541 = vmatpush.bf16.msra.mxu0 %v1348
    %1542 = vmatpush.bf16.msra.mxu0 %v1342
    %1543 = vmatpush.bf16.msra.mxu0 %v1336
    %1544 = vmatpush.bf16.msra.mxu0 %v1330
    %1545 = vmatmul.bf16.gmra.mxu0 %v895
    %v1546 = vpop.f32.mrf.mxu0
    %v1547 = vadd.f32 %v1534, %v1546
    %v1548 = vpop.f32.mrf.mxu0
    %1549 = vdwg.mxu0
    %1550 = vmatpush.bf16.msra.mxu0 %v1325
    %1551 = vmatpush.bf16.msra.mxu0 %v1319
    %1552 = vmatpush.bf16.msra.mxu0 %v1313
    %1553 = vmatpush.bf16.msra.mxu0 %v1307
    %1554 = vmatpush.bf16.msra.mxu0 %v1301
    %1555 = vmatpush.bf16.msra.mxu0 %v1295
    %1556 = vmatpush.bf16.msra.mxu0 %v1289
    %1557 = vmatpush.bf16.msra.mxu0 %v1283
    %1558 = vmatmul.bf16.gmra.mxu0 %v894
    %v1559 = vpop.f32.mrf.mxu0
    %v1560 = vadd.f32 0.0, %v1559
    %v1561 = vpop.f32.mrf.mxu0
    %1562 = vdwg.mxu0
    %1563 = vmatpush.bf16.msra.mxu0 %v1373
    %1564 = vmatpush.bf16.msra.mxu0 %v1367
    %1565 = vmatpush.bf16.msra.mxu0 %v1361
    %1566 = vmatpush.bf16.msra.mxu0 %v1355
    %1567 = vmatpush.bf16.msra.mxu0 %v1349
    %1568 = vmatpush.bf16.msra.mxu0 %v1343
    %1569 = vmatpush.bf16.msra.mxu0 %v1337
    %1570 = vmatpush.bf16.msra.mxu0 %v1331
    %1571 = vmatmul.bf16.gmra.mxu0 %v895
    %v1572 = vpop.f32.mrf.mxu0
    %v1573 = vadd.f32 %v1560, %v1572
    %v1574 = vpop.f32.mrf.mxu0
    %1575 = vdwg.mxu0
    %1576 = vmatpush.bf16.msra.mxu0 %v1326
    %1577 = vmatpush.bf16.msra.mxu0 %v1320
    %1578 = vmatpush.bf16.msra.mxu0 %v1314
    %1579 = vmatpush.bf16.msra.mxu0 %v1308
    %1580 = vmatpush.bf16.msra.mxu0 %v1302
    %1581 = vmatpush.bf16.msra.mxu0 %v1296
    %1582 = vmatpush.bf16.msra.mxu0 %v1290
    %1583 = vmatpush.bf16.msra.mxu0 %v1284
    %1584 = vmatmul.bf16.gmra.mxu0 %v894
    %v1585 = vpop.f32.mrf.mxu0
    %v1586 = vadd.f32 0.0, %v1585
    %v1587 = vpop.f32.mrf.mxu0
    %1588 = vdwg.mxu0
    %1589 = vmatpush.bf16.msra.mxu0 %v1374
    %1590 = vmatpush.bf16.msra.mxu0 %v1368
    %1591 = vmatpush.bf16.msra.mxu0 %v1362
    %1592 = vmatpush.bf16.msra.mxu0 %v1356
    %1593 = vmatpush.bf16.msra.mxu0 %v1350
    %1594 = vmatpush.bf16.msra.mxu0 %v1344
    %1595 = vmatpush.bf16.msra.mxu0 %v1338
    %1596 = vmatpush.bf16.msra.mxu0 %v1332
    %1597 = vmatmul.bf16.gmra.mxu0 %v895
    %v1598 = vpop.f32.mrf.mxu0
    %v1599 = vadd.f32 %v1586, %v1598
    %v1600 = vpop.f32.mrf.mxu0
    %1601 = vdwg.mxu0
    %1602 = vmatpush.bf16.msra.mxu0 %v1327
    %1603 = vmatpush.bf16.msra.mxu0 %v1321
    %1604 = vmatpush.bf16.msra.mxu0 %v1315
    %1605 = vmatpush.bf16.msra.mxu0 %v1309
    %1606 = vmatpush.bf16.msra.mxu0 %v1303
    %1607 = vmatpush.bf16.msra.mxu0 %v1297
    %1608 = vmatpush.bf16.msra.mxu0 %v1291
    %1609 = vmatpush.bf16.msra.mxu0 %v1285
    %1610 = vmatmul.bf16.gmra.mxu0 %v894
    %v1611 = vpop.f32.mrf.mxu0
    %v1612 = vadd.f32 0.0, %v1611
    %v1613 = vpop.f32.mrf.mxu0
    %1614 = vdwg.mxu0
    %1615 = vmatpush.bf16.msra.mxu0 %v1375
    %1616 = vmatpush.bf16.msra.mxu0 %v1369
    %1617 = vmatpush.bf16.msra.mxu0 %v1363
    %1618 = vmatpush.bf16.msra.mxu0 %v1357
    %1619 = vmatpush.bf16.msra.mxu0 %v1351
    %1620 = vmatpush.bf16.msra.mxu0 %v1345
    %1621 = vmatpush.bf16.msra.mxu0 %v1339
    %1622 = vmatpush.bf16.msra.mxu0 %v1333
    %1623 = vmatmul.bf16.gmra.mxu0 %v895
    %v1624 = vpop.f32.mrf.mxu0
    %v1625 = vadd.f32 %v1612, %v1624
    %v1626 = vpop.f32.mrf.mxu0
    %1627 = vdwg.mxu0
    %v1628 = vadd.f32 %v756, %v1495
    %v1629 = vadd.f32 %v782, %v1521
    %v1630 = vxor.u32 %v1628, 2147483648
    %v1631 = vxor.u32 %v1629, 2147483648
    %v1632 = vmul.f32 %v1630, 1.442695
    %v1633 = vpow.pop %v1632
    %v1634 = vmul.f32 %v1631, 1.442695
    %v1635 = vpow.pop %v1634
    %v1636 = vadd.f32 %v1633, 1.0
    %v1637 = vadd.f32 %v1635, 1.0
    %v1638 = vrcp.pop %v1636
    %v1639 = vmul.f32 %v1636, %v1638
    %v1640 = vsub.f32 1.0, %v1639
    %v1641 = vmul.f32 %v1638, %v1640
    %v1642 = vadd.f32 %v1638, %v1641
    %vm1643 = vweird.f32 %v1636
    %vm1644 = vweird.f32 %v1638
    %vm1645 = vmor %vm1643, %vm1644
    %v1646 = vsel %vm1645, %v1638, %v1642
    %v1647 = vand.u32 2147483647, %v1636
    %vm1648 = vcmp.eq.f32.partialorder %v1647, 8.507059e+37
    %v1649 = vand.u32 %v1636, 2147483648
    %v1650 = vor.u32 1.1754944e-38, %v1649
    %v1651 = vsel %vm1648, %v1650, %v1646
    %v1652 = vmul.f32 1.0, %v1651
    %v1653 = vrcp.pop %v1637
    %v1654 = vmul.f32 %v1637, %v1653
    %v1655 = vsub.f32 1.0, %v1654
    %v1656 = vmul.f32 %v1653, %v1655
    %v1657 = vadd.f32 %v1653, %v1656
    %vm1658 = vweird.f32 %v1637
    %vm1659 = vweird.f32 %v1653
    %vm1660 = vmor %vm1658, %vm1659
    %v1661 = vsel %vm1660, %v1653, %v1657
    %v1662 = vand.u32 2147483647, %v1637
    %vm1663 = vcmp.eq.f32.partialorder %v1662, 8.507059e+37
    %v1664 = vand.u32 %v1637, 2147483648
    %v1665 = vor.u32 1.1754944e-38, %v1664
    %v1666 = vsel %vm1663, %v1665, %v1661
    %v1667 = vmul.f32 1.0, %v1666
    %v1668 = vadd.f32 %v808, %v1547
    %v1669 = vadd.f32 %v834, %v1573
    %v1670 = vxor.u32 %v1668, 2147483648
    %v1671 = vxor.u32 %v1669, 2147483648
    %v1672 = vmul.f32 %v1670, 1.442695
    %v1673 = vpow.pop %v1672
    %v1674 = vmul.f32 %v1671, 1.442695
    %v1675 = vpow.pop %v1674
    %v1676 = vadd.f32 %v1673, 1.0
    %v1677 = vadd.f32 %v1675, 1.0
    %v1678 = vrcp.pop %v1676
    %v1679 = vmul.f32 %v1676, %v1678
    %v1680 = vsub.f32 1.0, %v1679
    %v1681 = vmul.f32 %v1678, %v1680
    %v1682 = vadd.f32 %v1678, %v1681
    %vm1683 = vweird.f32 %v1676
    %vm1684 = vweird.f32 %v1678
    %vm1685 = vmor %vm1683, %vm1684
    %v1686 = vsel %vm1685, %v1678, %v1682
    %v1687 = vand.u32 2147483647, %v1676
    %vm1688 = vcmp.eq.f32.partialorder %v1687, 8.507059e+37
    %v1689 = vand.u32 %v1676, 2147483648
    %v1690 = vor.u32 1.1754944e-38, %v1689
    %v1691 = vsel %vm1688, %v1690, %v1686
    %v1692 = vmul.f32 1.0, %v1691
    %v1693 = vrcp.pop %v1677
    %v1694 = vmul.f32 %v1677, %v1693
    %v1695 = vsub.f32 1.0, %v1694
    %v1696 = vmul.f32 %v1693, %v1695
    %v1697 = vadd.f32 %v1693, %v1696
    %vm1698 = vweird.f32 %v1677
    %vm1699 = vweird.f32 %v1693
    %vm1700 = vmor %vm1698, %vm1699
    %v1701 = vsel %vm1700, %v1693, %v1697
    %v1702 = vand.u32 2147483647, %v1677
    %vm1703 = vcmp.eq.f32.partialorder %v1702, 8.507059e+37
    %v1704 = vand.u32 %v1677, 2147483648
    %v1705 = vor.u32 1.1754944e-38, %v1704
    %v1706 = vsel %vm1703, %v1705, %v1701
    %v1707 = vmul.f32 1.0, %v1706
    %v1708 = vld [vmem:[#allocation10] sm:$0x3]
    %v1710 = vperm.slane %v1708, 0
    %v1711 = vperm.slane %v1708, 1
    %v1714 = vadd.f32 %v1599, %v1710
    %v1715 = vadd.f32 %v1625, %v1711
    %v1716 = vmul.f32 %v1652, %v1714
    %v1717 = vmul.f32 %v1667, %v1715
    %v1718 = vadd.f32 %v860, %v1716
    %v1719 = vadd.f32 %v886, %v1717
    %v1720 = vtanh.pop %v1718
    %v1721 = vtanh.pop %v1719
    %v1722 = vsub.f32 1.0, %v1692
    %v1723 = vsub.f32 1.0, %v1707
    %v1724 = vmul.f32 %v1722, %v1720
    %v1725 = vmul.f32 %v1723, %v1721
    %v1726 = vmul.f32 %v1692, %v890
    %v1727 = vmul.f32 %v1707, %v891
    %v1728 = vadd.f32 %v1724, %v1726
    %v1729 = vadd.f32 %v1725, %v1727
    %v1732 = vrot.slane %v1729, 7
    %vm1733 = vcmask 1040384
    %v1734 = vsel %vm1733, %v1728, %v1732
    %v1736 = vlaneseq
    %vm1737 = vcmp.ge.s32.totalorder %v1736, 0
    %vm1738 = vcmp.lt.s32.totalorder %v1736, 256
    %vm1739 = vmand %vm1737, %vm1738
    %1740 = vst.msk [vmem:[#allocation2] sm:$0x3] %vm1739, %v1734
    %1741 = vst.msk [vmem:[#allocation15] sm:$0x3] %vm1739, %v1734
    %v1742 = vpack.c.bf16 %v1728, %v1728
    %v1743 = vpack.c.bf16 %v1729, %v1729
    %v1744 = vld [vmem:[#allocation11] sm:$0xff]
    %v1745 = vld [vmem:[#allocation11 + $0x8] sm:$0xff]
    %v1746 = vld [vmem:[#allocation11 + $0x10] sm:$0xff]
    %v1747 = vld [vmem:[#allocation11 + $0x18] sm:$0xff]
    %v1748 = vld [vmem:[#allocation11 + $0x20] sm:$0xff]
    %v1749 = vld [vmem:[#allocation11 + $0x28] sm:$0xff]
    %v1750 = vld [vmem:[#allocation11 + $0x30] sm:$0xff]
    %v1751 = vld [vmem:[#allocation11 + $0x38] sm:$0xff]
    %v1752 = vld [vmem:[#allocation11 + $0x40] sm:$0xff]
    %v1753 = vld [vmem:[#allocation11 + $0x48] sm:$0xff]
    %v1754 = vld [vmem:[#allocation11 + $0x50] sm:$0xff]
    %v1755 = vld [vmem:[#allocation11 + $0x58] sm:$0xff]
    %v1756 = vld [vmem:[#allocation11 + $0x60] sm:$0xff]
    %v1757 = vld [vmem:[#allocation11 + $0x68] sm:$0xff]
    %v1758 = vld [vmem:[#allocation11 + $0x70] sm:$0xff]
    %v1759 = vld [vmem:[#allocation11 + $0x78] sm:$0xff]
    %v1760 = vld [vmem:[#allocation11 + $0x80] sm:$0xff]
    %v1761 = vld [vmem:[#allocation11 + $0x88] sm:$0xff]
    %v1762 = vld [vmem:[#allocation11 + $0x90] sm:$0xff]
    %v1763 = vld [vmem:[#allocation11 + $0x98] sm:$0xff]
    %v1764 = vld [vmem:[#allocation11 + $0xa0] sm:$0xff]
    %v1765 = vld [vmem:[#allocation11 + $0xa8] sm:$0xff]
    %v1766 = vld [vmem:[#allocation11 + $0xb0] sm:$0xff]
    %v1767 = vld [vmem:[#allocation11 + $0xb8] sm:$0xff]
    %v1768 = vld [vmem:[#allocation11 + $0xc0] sm:$0xff]
    %v1769 = vld [vmem:[#allocation11 + $0xc8] sm:$0xff]
    %v1770 = vld [vmem:[#allocation11 + $0xd0] sm:$0xff]
    %v1771 = vld [vmem:[#allocation11 + $0xd8] sm:$0xff]
    %v1772 = vld [vmem:[#allocation11 + $0xe0] sm:$0xff]
    %v1773 = vld [vmem:[#allocation11 + $0xe8] sm:$0xff]
    %v1774 = vld [vmem:[#allocation11 + $0xf0] sm:$0xff]
    %v1775 = vld [vmem:[#allocation11 + $0xf8] sm:$0xff]
    %v1776 = vld [vmem:[#allocation11 + $0x100] sm:$0xff]
    %v1777 = vld [vmem:[#allocation11 + $0x108] sm:$0xff]
    %v1778 = vld [vmem:[#allocation11 + $0x110] sm:$0xff]
    %v1779 = vld [vmem:[#allocation11 + $0x118] sm:$0xff]
    %v1780 = vld [vmem:[#allocation11 + $0x120] sm:$0xff]
    %v1781 = vld [vmem:[#allocation11 + $0x128] sm:$0xff]
    %v1782 = vld [vmem:[#allocation11 + $0x130] sm:$0xff]
    %v1783 = vld [vmem:[#allocation11 + $0x138] sm:$0xff]
    %v1784 = vld [vmem:[#allocation11 + $0x140] sm:$0xff]
    %v1785 = vld [vmem:[#allocation11 + $0x148] sm:$0xff]
    %v1786 = vld [vmem:[#allocation11 + $0x150] sm:$0xff]
    %v1787 = vld [vmem:[#allocation11 + $0x158] sm:$0xff]
    %v1788 = vld [vmem:[#allocation11 + $0x160] sm:$0xff]
    %v1789 = vld [vmem:[#allocation11 + $0x168] sm:$0xff]
    %v1790 = vld [vmem:[#allocation11 + $0x170] sm:$0xff]
    %v1791 = vld [vmem:[#allocation11 + $0x178] sm:$0xff]
    %v1792 = vld [vmem:[#allocation11 + $0x180] sm:$0xff]
    %v1793 = vld [vmem:[#allocation11 + $0x188] sm:$0xff]
    %v1794 = vld [vmem:[#allocation11 + $0x190] sm:$0xff]
    %v1795 = vld [vmem:[#allocation11 + $0x198] sm:$0xff]
    %v1796 = vld [vmem:[#allocation11 + $0x1a0] sm:$0xff]
    %v1797 = vld [vmem:[#allocation11 + $0x1a8] sm:$0xff]
    %v1798 = vld [vmem:[#allocation11 + $0x1b0] sm:$0xff]
    %v1799 = vld [vmem:[#allocation11 + $0x1b8] sm:$0xff]
    %v1800 = vld [vmem:[#allocation11 + $0x1c0] sm:$0xff]
    %v1801 = vld [vmem:[#allocation11 + $0x1c8] sm:$0xff]
    %v1802 = vld [vmem:[#allocation11 + $0x1d0] sm:$0xff]
    %v1803 = vld [vmem:[#allocation11 + $0x1d8] sm:$0xff]
    %v1804 = vld [vmem:[#allocation11 + $0x1e0] sm:$0xff]
    %v1805 = vld [vmem:[#allocation11 + $0x1e8] sm:$0xff]
    %v1806 = vld [vmem:[#allocation11 + $0x1f0] sm:$0xff]
    %v1807 = vld [vmem:[#allocation11 + $0x1f8] sm:$0xff]
    %v1808 = vld [vmem:[#allocation13] sm:$0xf]
    %v1873 = vunpack.c.l.b16 %v1744
    %v1874 = vunpack.c.h.b16 %v1744
    %v1875 = vunpack.c.l.b16 %v1745
    %v1876 = vunpack.c.h.b16 %v1745
    %v1877 = vunpack.c.l.b16 %v1746
    %v1878 = vunpack.c.h.b16 %v1746
    %v1879 = vunpack.c.l.b16 %v1747
    %v1880 = vunpack.c.h.b16 %v1747
    %v1881 = vunpack.c.l.b16 %v1748
    %v1882 = vunpack.c.h.b16 %v1748
    %v1883 = vunpack.c.l.b16 %v1749
    %v1884 = vunpack.c.h.b16 %v1749
    %v1885 = vunpack.c.l.b16 %v1750
    %v1886 = vunpack.c.h.b16 %v1750
    %v1887 = vunpack.c.l.b16 %v1751
    %v1888 = vunpack.c.h.b16 %v1751
    %v1889 = vunpack.c.l.b16 %v1752
    %v1890 = vunpack.c.h.b16 %v1752
    %v1891 = vunpack.c.l.b16 %v1753
    %v1892 = vunpack.c.h.b16 %v1753
    %v1893 = vunpack.c.l.b16 %v1754
    %v1894 = vunpack.c.h.b16 %v1754
    %v1895 = vunpack.c.l.b16 %v1755
    %v1896 = vunpack.c.h.b16 %v1755
    %v1897 = vunpack.c.l.b16 %v1756
    %v1898 = vunpack.c.h.b16 %v1756
    %v1899 = vunpack.c.l.b16 %v1757
    %v1900 = vunpack.c.h.b16 %v1757
    %v1901 = vunpack.c.l.b16 %v1758
    %v1902 = vunpack.c.h.b16 %v1758
    %v1903 = vunpack.c.l.b16 %v1759
    %v1904 = vunpack.c.h.b16 %v1759
    %v1905 = vunpack.c.l.b16 %v1760
    %v1906 = vunpack.c.h.b16 %v1760
    %v1907 = vunpack.c.l.b16 %v1761
    %v1908 = vunpack.c.h.b16 %v1761
    %v1909 = vunpack.c.l.b16 %v1762
    %v1910 = vunpack.c.h.b16 %v1762
    %v1911 = vunpack.c.l.b16 %v1763
    %v1912 = vunpack.c.h.b16 %v1763
    %v1913 = vunpack.c.l.b16 %v1764
    %v1914 = vunpack.c.h.b16 %v1764
    %v1915 = vunpack.c.l.b16 %v1765
    %v1916 = vunpack.c.h.b16 %v1765
    %v1917 = vunpack.c.l.b16 %v1766
    %v1918 = vunpack.c.h.b16 %v1766
    %v1919 = vunpack.c.l.b16 %v1767
    %v1920 = vunpack.c.h.b16 %v1767
    %v1921 = vunpack.c.l.b16 %v1768
    %v1922 = vunpack.c.h.b16 %v1768
    %v1923 = vunpack.c.l.b16 %v1769
    %v1924 = vunpack.c.h.b16 %v1769
    %v1925 = vunpack.c.l.b16 %v1770
    %v1926 = vunpack.c.h.b16 %v1770
    %v1927 = vunpack.c.l.b16 %v1771
    %v1928 = vunpack.c.h.b16 %v1771
    %v1929 = vunpack.c.l.b16 %v1772
    %v1930 = vunpack.c.h.b16 %v1772
    %v1931 = vunpack.c.l.b16 %v1773
    %v1932 = vunpack.c.h.b16 %v1773
    %v1933 = vunpack.c.l.b16 %v1774
    %v1934 = vunpack.c.h.b16 %v1774
    %v1935 = vunpack.c.l.b16 %v1775
    %v1936 = vunpack.c.h.b16 %v1775
    %v1937 = vunpack.c.l.b16 %v1776
    %v1938 = vunpack.c.h.b16 %v1776
    %v1939 = vunpack.c.l.b16 %v1777
    %v1940 = vunpack.c.h.b16 %v1777
    %v1941 = vunpack.c.l.b16 %v1778
    %v1942 = vunpack.c.h.b16 %v1778
    %v1943 = vunpack.c.l.b16 %v1779
    %v1944 = vunpack.c.h.b16 %v1779
    %v1945 = vunpack.c.l.b16 %v1780
    %v1946 = vunpack.c.h.b16 %v1780
    %v1947 = vunpack.c.l.b16 %v1781
    %v1948 = vunpack.c.h.b16 %v1781
    %v1949 = vunpack.c.l.b16 %v1782
    %v1950 = vunpack.c.h.b16 %v1782
    %v1951 = vunpack.c.l.b16 %v1783
    %v1952 = vunpack.c.h.b16 %v1783
    %v1953 = vunpack.c.l.b16 %v1784
    %v1954 = vunpack.c.h.b16 %v1784
    %v1955 = vunpack.c.l.b16 %v1785
    %v1956 = vunpack.c.h.b16 %v1785
    %v1957 = vunpack.c.l.b16 %v1786
    %v1958 = vunpack.c.h.b16 %v1786
    %v1959 = vunpack.c.l.b16 %v1787
    %v1960 = vunpack.c.h.b16 %v1787
    %v1961 = vunpack.c.l.b16 %v1788
    %v1962 = vunpack.c.h.b16 %v1788
    %v1963 = vunpack.c.l.b16 %v1789
    %v1964 = vunpack.c.h.b16 %v1789
    %v1965 = vunpack.c.l.b16 %v1790
    %v1966 = vunpack.c.h.b16 %v1790
    %v1967 = vunpack.c.l.b16 %v1791
    %v1968 = vunpack.c.h.b16 %v1791
    %v1969 = vunpack.c.l.b16 %v1792
    %v1970 = vunpack.c.h.b16 %v1792
    %v1971 = vunpack.c.l.b16 %v1793
    %v1972 = vunpack.c.h.b16 %v1793
    %v1973 = vunpack.c.l.b16 %v1794
    %v1974 = vunpack.c.h.b16 %v1794
    %v1975 = vunpack.c.l.b16 %v1795
    %v1976 = vunpack.c.h.b16 %v1795
    %v1977 = vunpack.c.l.b16 %v1796
    %v1978 = vunpack.c.h.b16 %v1796
    %v1979 = vunpack.c.l.b16 %v1797
    %v1980 = vunpack.c.h.b16 %v1797
    %v1981 = vunpack.c.l.b16 %v1798
    %v1982 = vunpack.c.h.b16 %v1798
    %v1983 = vunpack.c.l.b16 %v1799
    %v1984 = vunpack.c.h.b16 %v1799
    %v1985 = vunpack.c.l.b16 %v1800
    %v1986 = vunpack.c.h.b16 %v1800
    %v1987 = vunpack.c.l.b16 %v1801
    %v1988 = vunpack.c.h.b16 %v1801
    %v1989 = vunpack.c.l.b16 %v1802
    %v1990 = vunpack.c.h.b16 %v1802
    %v1991 = vunpack.c.l.b16 %v1803
    %v1992 = vunpack.c.h.b16 %v1803
    %v1993 = vunpack.c.l.b16 %v1804
    %v1994 = vunpack.c.h.b16 %v1804
    %v1995 = vunpack.c.l.b16 %v1805
    %v1996 = vunpack.c.h.b16 %v1805
    %v1997 = vunpack.c.l.b16 %v1806
    %v1998 = vunpack.c.h.b16 %v1806
    %v1999 = vunpack.c.l.b16 %v1807
    %v2000 = vunpack.c.h.b16 %v1807
    %v2001 = vpack.c.b16 %v1877, %v1873
    %v2002 = vpack.c.b16 %v1878, %v1874
    %v2003 = vpack.c.b16 %v1879, %v1875
    %v2004 = vpack.c.b16 %v1880, %v1876
    %v2005 = vpack.c.b16 %v1885, %v1881
    %v2006 = vpack.c.b16 %v1886, %v1882
    %v2007 = vpack.c.b16 %v1887, %v1883
    %v2008 = vpack.c.b16 %v1888, %v1884
    %v2009 = vpack.c.b16 %v1893, %v1889
    %v2010 = vpack.c.b16 %v1894, %v1890
    %v2011 = vpack.c.b16 %v1895, %v1891
    %v2012 = vpack.c.b16 %v1896, %v1892
    %v2013 = vpack.c.b16 %v1901, %v1897
    %v2014 = vpack.c.b16 %v1902, %v1898
    %v2015 = vpack.c.b16 %v1903, %v1899
    %v2016 = vpack.c.b16 %v1904, %v1900
    %v2017 = vpack.c.b16 %v1909, %v1905
    %v2018 = vpack.c.b16 %v1910, %v1906
    %v2019 = vpack.c.b16 %v1911, %v1907
    %v2020 = vpack.c.b16 %v1912, %v1908
    %v2021 = vpack.c.b16 %v1917, %v1913
    %v2022 = vpack.c.b16 %v1918, %v1914
    %v2023 = vpack.c.b16 %v1919, %v1915
    %v2024 = vpack.c.b16 %v1920, %v1916
    %v2025 = vpack.c.b16 %v1925, %v1921
    %v2026 = vpack.c.b16 %v1926, %v1922
    %v2027 = vpack.c.b16 %v1927, %v1923
    %v2028 = vpack.c.b16 %v1928, %v1924
    %v2029 = vpack.c.b16 %v1933, %v1929
    %v2030 = vpack.c.b16 %v1934, %v1930
    %v2031 = vpack.c.b16 %v1935, %v1931
    %v2032 = vpack.c.b16 %v1936, %v1932
    %v2033 = vpack.c.b16 %v1941, %v1937
    %v2034 = vpack.c.b16 %v1942, %v1938
    %v2035 = vpack.c.b16 %v1943, %v1939
    %v2036 = vpack.c.b16 %v1944, %v1940
    %v2037 = vpack.c.b16 %v1949, %v1945
    %v2038 = vpack.c.b16 %v1950, %v1946
    %v2039 = vpack.c.b16 %v1951, %v1947
    %v2040 = vpack.c.b16 %v1952, %v1948
    %v2041 = vpack.c.b16 %v1957, %v1953
    %v2042 = vpack.c.b16 %v1958, %v1954
    %v2043 = vpack.c.b16 %v1959, %v1955
    %v2044 = vpack.c.b16 %v1960, %v1956
    %v2045 = vpack.c.b16 %v1965, %v1961
    %v2046 = vpack.c.b16 %v1966, %v1962
    %v2047 = vpack.c.b16 %v1967, %v1963
    %v2048 = vpack.c.b16 %v1968, %v1964
    %v2049 = vpack.c.b16 %v1973, %v1969
    %v2050 = vpack.c.b16 %v1974, %v1970
    %v2051 = vpack.c.b16 %v1975, %v1971
    %v2052 = vpack.c.b16 %v1976, %v1972
    %v2053 = vpack.c.b16 %v1981, %v1977
    %v2054 = vpack.c.b16 %v1982, %v1978
    %v2055 = vpack.c.b16 %v1983, %v1979
    %v2056 = vpack.c.b16 %v1984, %v1980
    %v2057 = vpack.c.b16 %v1989, %v1985
    %v2058 = vpack.c.b16 %v1990, %v1986
    %v2059 = vpack.c.b16 %v1991, %v1987
    %v2060 = vpack.c.b16 %v1992, %v1988
    %v2061 = vpack.c.b16 %v1997, %v1993
    %v2062 = vpack.c.b16 %v1998, %v1994
    %v2063 = vpack.c.b16 %v1999, %v1995
    %v2064 = vpack.c.b16 %v2000, %v1996
    %v2130 = vperm.slane %v1808, 0
    %v2131 = vperm.slane %v1808, 1
    %v2132 = vperm.slane %v1808, 2
    %v2133 = vperm.slane %v1808, 3
    %2138 = vmatpush.bf16.msra.mxu0 %v2029
    %2139 = vmatpush.bf16.msra.mxu0 %v2025
    %2140 = vmatpush.bf16.msra.mxu0 %v2021
    %2141 = vmatpush.bf16.msra.mxu0 %v2017
    %2142 = vmatpush.bf16.msra.mxu0 %v2013
    %2143 = vmatpush.bf16.msra.mxu0 %v2009
    %2144 = vmatpush.bf16.msra.mxu0 %v2005
    %2145 = vmatpush.bf16.msra.mxu0 %v2001
    %2146 = vmatmul.bf16.gmra.mxu0 %v1742
    %v2147 = vpop.f32.mrf.mxu0
    %v2148 = vadd.f32 %v2130, %v2147
    %v2149 = vpop.f32.mrf.mxu0
    %2150 = vdwg.mxu0
    %2151 = vmatpush.bf16.msra.mxu0 %v2061
    %2152 = vmatpush.bf16.msra.mxu0 %v2057
    %2153 = vmatpush.bf16.msra.mxu0 %v2053
    %2154 = vmatpush.bf16.msra.mxu0 %v2049
    %2155 = vmatpush.bf16.msra.mxu0 %v2045
    %2156 = vmatpush.bf16.msra.mxu0 %v2041
    %2157 = vmatpush.bf16.msra.mxu0 %v2037
    %2158 = vmatpush.bf16.msra.mxu0 %v2033
    %2159 = vmatmul.bf16.gmra.mxu0 %v1743
    %v2160 = vpop.f32.mrf.mxu0
    %v2161 = vadd.f32 %v2148, %v2160
    %v2162 = vpop.f32.mrf.mxu0
    %2163 = vdwg.mxu0
    %2164 = vmatpush.bf16.msra.mxu0 %v2030
    %2165 = vmatpush.bf16.msra.mxu0 %v2026
    %2166 = vmatpush.bf16.msra.mxu0 %v2022
    %2167 = vmatpush.bf16.msra.mxu0 %v2018
    %2168 = vmatpush.bf16.msra.mxu0 %v2014
    %2169 = vmatpush.bf16.msra.mxu0 %v2010
    %2170 = vmatpush.bf16.msra.mxu0 %v2006
    %2171 = vmatpush.bf16.msra.mxu0 %v2002
    %2172 = vmatmul.bf16.gmra.mxu0 %v1742
    %v2173 = vpop.f32.mrf.mxu0
    %v2174 = vadd.f32 %v2131, %v2173
    %v2175 = vpop.f32.mrf.mxu0
    %2176 = vdwg.mxu0
    %2177 = vmatpush.bf16.msra.mxu0 %v2062
    %2178 = vmatpush.bf16.msra.mxu0 %v2058
    %2179 = vmatpush.bf16.msra.mxu0 %v2054
    %2180 = vmatpush.bf16.msra.mxu0 %v2050
    %2181 = vmatpush.bf16.msra.mxu0 %v2046
    %2182 = vmatpush.bf16.msra.mxu0 %v2042
    %2183 = vmatpush.bf16.msra.mxu0 %v2038
    %2184 = vmatpush.bf16.msra.mxu0 %v2034
    %2185 = vmatmul.bf16.gmra.mxu0 %v1743
    %v2186 = vpop.f32.mrf.mxu0
    %v2187 = vadd.f32 %v2174, %v2186
    %v2188 = vpop.f32.mrf.mxu0
    %2189 = vdwg.mxu0
    %2190 = vmatpush.bf16.msra.mxu0 %v2031
    %2191 = vmatpush.bf16.msra.mxu0 %v2027
    %2192 = vmatpush.bf16.msra.mxu0 %v2023
    %2193 = vmatpush.bf16.msra.mxu0 %v2019
    %2194 = vmatpush.bf16.msra.mxu0 %v2015
    %2195 = vmatpush.bf16.msra.mxu0 %v2011
    %2196 = vmatpush.bf16.msra.mxu0 %v2007
    %2197 = vmatpush.bf16.msra.mxu0 %v2003
    %2198 = vmatmul.bf16.gmra.mxu0 %v1742
    %v2199 = vpop.f32.mrf.mxu0
    %v2200 = vadd.f32 %v2132, %v2199
    %v2201 = vpop.f32.mrf.mxu0
    %2202 = vdwg.mxu0
    %2203 = vmatpush.bf16.msra.mxu0 %v2063
    %2204 = vmatpush.bf16.msra.mxu0 %v2059
    %2205 = vmatpush.bf16.msra.mxu0 %v2055
    %2206 = vmatpush.bf16.msra.mxu0 %v2051
    %2207 = vmatpush.bf16.msra.mxu0 %v2047
    %2208 = vmatpush.bf16.msra.mxu0 %v2043
    %2209 = vmatpush.bf16.msra.mxu0 %v2039
    %2210 = vmatpush.bf16.msra.mxu0 %v2035
    %2211 = vmatmul.bf16.gmra.mxu0 %v1743
    %v2212 = vpop.f32.mrf.mxu0
    %v2213 = vadd.f32 %v2200, %v2212
    %v2214 = vpop.f32.mrf.mxu0
    %2215 = vdwg.mxu0
    %2216 = vmatpush.bf16.msra.mxu0 %v2032
    %2217 = vmatpush.bf16.msra.mxu0 %v2028
    %2218 = vmatpush.bf16.msra.mxu0 %v2024
    %2219 = vmatpush.bf16.msra.mxu0 %v2020
    %2220 = vmatpush.bf16.msra.mxu0 %v2016
    %2221 = vmatpush.bf16.msra.mxu0 %v2012
    %2222 = vmatpush.bf16.msra.mxu0 %v2008
    %2223 = vmatpush.bf16.msra.mxu0 %v2004
    %2224 = vmatmul.bf16.gmra.mxu0 %v1742
    %v2225 = vpop.f32.mrf.mxu0
    %v2226 = vadd.f32 %v2133, %v2225
    %v2227 = vpop.f32.mrf.mxu0
    %2228 = vdwg.mxu0
    %2229 = vmatpush.bf16.msra.mxu0 %v2064
    %2230 = vmatpush.bf16.msra.mxu0 %v2060
    %2231 = vmatpush.bf16.msra.mxu0 %v2056
    %2232 = vmatpush.bf16.msra.mxu0 %v2052
    %2233 = vmatpush.bf16.msra.mxu0 %v2048
    %2234 = vmatpush.bf16.msra.mxu0 %v2044
    %2235 = vmatpush.bf16.msra.mxu0 %v2040
    %2236 = vmatpush.bf16.msra.mxu0 %v2036
    %2237 = vmatmul.bf16.gmra.mxu0 %v1743
    %v2238 = vpop.f32.mrf.mxu0
    %v2239 = vadd.f32 %v2226, %v2238
    %v2240 = vpop.f32.mrf.mxu0
    %2241 = vdwg.mxu0
    %v2242 = vsel %vm1733, %v2161, -inf
    %v2243 = vsel %vm1733, %v2187, -inf
    %v2244 = vsel %vm1733, %v2213, -inf
    %v2245 = vsel %vm1733, %v2239, -inf
    %v2246 = vmax.f32 %v2242, %v2243
    %v2247 = vmax.f32 %v2244, %v2245
    %v2248 = vmax.f32 %v2246, %v2247
    %2249 = vmax.xlane.f32.xlu0 %v2248
    %v2250 = vpop.xlane.xlu0 %2249
    %v2251 = vsub.f32 %v2161, %v2250
    %v2252 = vsub.f32 %v2187, %v2250
    %v2253 = vsub.f32 %v2213, %v2250
    %v2254 = vsub.f32 %v2239, %v2250
    %v2255 = vmul.f32 %v2251, 1.442695
    %v2256 = vpow.pop %v2255
    %v2257 = vmul.f32 %v2252, 1.442695
    %v2258 = vpow.pop %v2257
    %v2259 = vmul.f32 %v2253, 1.442695
    %v2260 = vpow.pop %v2259
    %v2261 = vmul.f32 %v2254, 1.442695
    %v2262 = vpow.pop %v2261
    %v2263 = vsel %vm1733, %v2256, 0.0
    %v2264 = vsel %vm1733, %v2258, 0.0
    %v2265 = vadd.f32 %v2263, %v2264
    %v2266 = vsel %vm1733, %v2260, 0.0
    %v2267 = vadd.f32 %v2265, %v2266
    %v2268 = vsel %vm1733, %v2262, 0.0
    %v2269 = vadd.f32 %v2267, %v2268
    %2270 = vadd.xlane.f32.xlu0 %v2269
    %v2271 = vpop.xlane.xlu0 %2270
    %v2272 = vlog2.pop %v2271
    %v2273 = vmul.f32 %v2272, 0.6931472
    %v2274 = vadd.f32 %v2273, %v2250
    %v2275 = vsub.f32 %v2161, %v2274
    %v2276 = vsub.f32 %v2187, %v2274
    %v2277 = vsub.f32 %v2213, %v2274
    %v2278 = vsub.f32 %v2239, %v2274
    %v2283 = vrot.slane %v2276, 7
    %v2284 = vrot.slane %v2277, 6
    %v2285 = vrot.slane %v2278, 5
    %v2286 = vsel %vm1733, %v2275, %v2283
    %vm2287 = vcmask 1042434
    %v2288 = vsel %vm2287, %v2284, %v2285
    %vm2289 = vcmask 1041408
    %v2290 = vsel %vm2289, %v2286, %v2288
    %vm2292 = vcmp.lt.s32.totalorder %v1736, 512
    %vm2293 = vmand %vm1737, %vm2292
    %2294 = vst.msk [vmem:[#allocation14] sm:$0xf] %vm2293, %v2290
    // Predicated region
    $region58: #{tpu_custom_call.1} parent=1 // pred_check
      _
    $region59: #{tpu_custom_call.1} parent=1 // pred_check_branch
      %2296 = sbr.rel (0) target = $region61
    $region60: #{tpu_custom_call.1} parent=1 // pred_region
      %2298 = vsyncadd [#allocation7], 0
      %s2300 = sshll.u32 [#allocation14], 4
      %s2301 = int_to_ptr.vmem [resolvable:$true] %s2300
      %s2302 = sshll.u32 %s9, 4
      %s2303 = int_to_ptr.hbm [resolvable:$true] %s2302
      %2305 = dma.vmem_to_hbm [thread:$0]  %s2301, 64, %s2303, [#allocation7]
    $region61: #{tpu_custom_call.1} parent=1 // pred_fallthru
      _
    // Predicated region
    $region62: #{tpu_custom_call.1} parent=1 // pred_check
      _
    $region63: #{tpu_custom_call.1} parent=1 // pred_check_branch
      %2307 = sbr.rel (0) target = $region65
    $region64: #{tpu_custom_call.1} parent=1 // pred_region
      %2309 = vsyncadd [#allocation16], 0
      %s2311 = sshll.u32 [#allocation15], 4
      %s2312 = int_to_ptr.vmem [resolvable:$true] %s2311
      %s2313 = sshll.u32 %s10, 4
      %s2314 = int_to_ptr.hbm [resolvable:$true] %s2313
      %2316 = dma.vmem_to_hbm [thread:$0]  %s2312, 32, %s2314, [#allocation16]
    $region65: #{tpu_custom_call.1} parent=1 // pred_fallthru
      _
    // Predicated region
    $region66: #{tpu_custom_call.1} parent=1 // pred_check
      _
    $region67: #{tpu_custom_call.1} parent=1 // pred_check_branch
      %2318 = sbr.rel (0) target = $region69
    $region68: #{tpu_custom_call.1} parent=1 // pred_region
      %2320 = dma.done [#allocation7], 64
    $region69: #{tpu_custom_call.1} parent=1 // pred_fallthru
      _
    // Predicated region
    $region70: #{tpu_custom_call.1} parent=1 // pred_check
      _
    $region71: #{tpu_custom_call.1} parent=1 // pred_check_branch
      %2322 = sbr.rel (0) target = $region73
    $region72: #{tpu_custom_call.1} parent=1 // pred_region
      %2324 = dma.done [#allocation16], 32
    $region73: #{tpu_custom_call.1} parent=1 // pred_fallthru
      _
    %2325 = vsyncpa [#allocation6], 1
    %2326 = vsyncpa [#allocation9], 1
    %2327 = vsyncpa [#allocation12], 1
    %2328 = vsyncpa [#allocation7], 1
    %2329 = vsyncpa [#allocation16], 1

</llo_original>
